<compile_context>
chip_gen: v7x
topology: tpu7x:2x2x1
jax: 0.10.0
libtpu: 0.0.40
codegen_flags: <defaults>
</compile_context>

<pallas_src>
import functools
import math

import jax
import jax.numpy as jnp
from jax.experimental import pallas as pl
from jax.experimental.pallas import tpu as pltpu

EPS = 1e-5


# ----------------------------------------------------------------------------
# Pallas kernel: (8*Co, Ci) @ (Ci, ts) with fused per-row affine + ReLU epilogue.
# Weights / scale / shift are single full-extent blocks (resident in VMEM);
# there is no reduction grid axis.  Accumulation and epilogue are f32; the
# output is stored in o_ref.dtype (bf16 on the production path).
# ----------------------------------------------------------------------------
def _deconv_affine_kernel(x_ref, w_ref, s_ref, b_ref, o_ref, *, relu):
    # x_ref: (1, Ci, ts) f32   -> cast to the MXU dtype in VMEM (no extra HBM pass)
    # w_ref: (8*Co, Ci)  bf16  (resident)
    # s_ref/b_ref: (8*Co, 1) f32 (resident)
    # o_ref: (1, 8*Co, ts) bf16
    x = x_ref[0].astype(w_ref.dtype)                                   # (Ci, ts)
    acc = jnp.dot(w_ref[...], x, preferred_element_type=jnp.float32)   # (8Co, ts)
    y = acc * s_ref[...] + b_ref[...]
    if relu:
        y = jnp.maximum(y, 0.0)
    o_ref[0] = y.astype(o_ref.dtype)


def _pick_spatial_tile(S, B, ts_max=2048):
    """Spatial (lane) tile: full extent if it fits, else a multiple of 128.

    When B == 1 and the full extent would leave a single grid point, split it so
    v7x's two TensorCores both get work (both grid axes are 'parallel')."""
    if S <= ts_max:
        if B == 1 and S >= 256 and S % 256 == 0:
            return S // 2
        return S
    return ts_max  # multiple of 128; ragged tail handled by Pallas masked stores


def deconv_bn_relu_matmul(x3, w2t, scale, shift, *, relu=True, ts_max=2048):
    """x3: (B, Ci, S) f32 (native NCDHW view), w2t: (8*Co, Ci) in compute dtype,
    scale/shift: (8*Co, 1) f32 -> (B, 8*Co, S) in w2t.dtype."""
    B, Ci, S = x3.shape
    N8 = w2t.shape[0]
    ts = _pick_spatial_tile(S, B, ts_max)
    grid = (B, pl.cdiv(S, ts))

    return pl.pallas_call(
        functools.partial(_deconv_affine_kernel, relu=relu),
        out_shape=jax.ShapeDtypeStruct((B, N8, S), w2t.dtype),
        grid_spec=pltpu.PrefetchScalarGridSpec(
            num_scalar_prefetch=0,
            grid=grid,
            in_specs=[
                pl.BlockSpec((1, Ci, ts), lambda b, s: (b, 0, s)),  # activations
                pl.BlockSpec((N8, Ci), lambda b, s: (0, 0)),        # resident W^T
                pl.BlockSpec((N8, 1), lambda b, s: (0, 0)),         # resident scale
                pl.BlockSpec((N8, 1), lambda b, s: (0, 0)),         # resident shift
            ],
            out_specs=pl.BlockSpec((1, N8, ts), lambda b, s: (b, 0, s)),
        ),
        compiler_params=pltpu.CompilerParams(
            dimension_semantics=("parallel", "parallel")),
    )(x3, w2t, scale, shift)


# ----------------------------------------------------------------------------
# Weight / BN packing (done once, outside the jitted forward)
# ----------------------------------------------------------------------------
def pack_upsample_params(weight, bias, gamma, beta, running_mean, running_var,
                         eps=EPS, compute_dtype=jnp.bfloat16):
    """weight: PyTorch ConvTranspose3d layout (Ci, Co, 2, 2, 2).

    Returns W^T with rows ordered (co, kd, kh, kw) + fused affine columns."""
    Ci, Co = weight.shape[0], weight.shape[1]
    # rows ordered (co, kd, kh, kw)
    w2t = jnp.transpose(weight, (1, 2, 3, 4, 0)).reshape(Co * 8, Ci)
    w2t = w2t.astype(compute_dtype)
    bn_scale = gamma / jnp.sqrt(running_var + eps)
    bn_shift = beta - running_mean * bn_scale
    scale = jnp.repeat(bn_scale, 8).reshape(Co * 8, 1).astype(jnp.float32)
    shift = jnp.repeat(bias * bn_scale + bn_shift, 8).reshape(Co * 8, 1)
    shift = shift.astype(jnp.float32)
    return {'w2t': w2t, 'scale': scale, 'shift': shift}


# ----------------------------------------------------------------------------
# Forward: NCDHW in -> NCDHW out (matches the PyTorch module)
# ----------------------------------------------------------------------------
def upsample3d_block(x_ncdhw, packed, out_dtype=jnp.float32):
    B, Ci, D, H, W = x_ncdhw.shape
    N8 = packed['w2t'].shape[0]
    Co = N8 // 8
    S = D * H * W

    # Native NCDHW layout read directly as (Ci, spatial) tiles -- free view,
    # no standalone activation-transpose pass over HBM.
    x3 = x_ncdhw.reshape(B, Ci, S)
    out = deconv_bn_relu_matmul(x3, packed['w2t'], packed['scale'],
                                packed['shift'], relu=True)

    # (B, 8*Co, S) -> (B, Co, 2D, 2H, 2W): pixel-shuffle + channel-first layout
    # fused into ONE transpose of the (bf16) kernel output; the f32 cast fuses
    # into the same pass.
    out = out.reshape(B, Co, 2, 2, 2, D, H, W)
    out = jnp.transpose(out, (0, 1, 5, 2, 6, 3, 7, 4)).astype(out_dtype)
    return out.reshape(B, Co, 2 * D, 2 * H, 2 * W)


if __name__ == "__main__":
    key = jax.random.PRNGKey(0)
    k_w, k_b, k_g, k_be, k_m, k_v, k_x = jax.random.split(key, 7)

    B, Ci, Co, D, H, W = 2, 64, 32, 8, 8, 8

    std = math.sqrt(2.0 / (Ci * 8 + Co * 8))
    weight = jax.random.normal(k_w, (Ci, Co, 2, 2, 2), jnp.float32) * std
    bias = jax.random.normal(k_b, (Co,), jnp.float32) * 0.05
    gamma = 1.0 + 0.2 * jax.random.normal(k_g, (Co,), jnp.float32)
    beta = 0.1 * jax.random.normal(k_be, (Co,), jnp.float32)
    running_mean = 0.1 * jax.random.normal(k_m, (Co,), jnp.float32)
    running_var = 1.0 + 0.2 * jax.random.uniform(k_v, (Co,), jnp.float32)

    x = jax.random.normal(k_x, (B, Ci, D, H, W), jnp.float32)

    packed_bf16 = pack_upsample_params(weight, bias, gamma, beta,
                                       running_mean, running_var,
                                       compute_dtype=jnp.bfloat16)
    packed_f32 = pack_upsample_params(weight, bias, gamma, beta,
                                      running_mean, running_var,
                                      compute_dtype=jnp.float32)

    fwd = jax.jit(upsample3d_block)
    out = jax.block_until_ready(fwd(x, packed_bf16))
    assert out.shape == (B, Co, 2 * D, 2 * H, 2 * W), out.shape
    assert out.dtype == jnp.float32
    assert bool(jnp.all(jnp.isfinite(out)))

    # Independent reference (f32): ConvTranspose3d(k=2,s=2) scatter + BN(eval) + ReLU.
    bn_scale = gamma / jnp.sqrt(running_var + EPS)
    bn_shift = beta - running_mean * bn_scale
    ref = jnp.zeros((B, Co, 2 * D, 2 * H, 2 * W), jnp.float32)
    for kd in range(2):
        for kh in range(2):
            for kw in range(2):
                contrib = jnp.einsum('bcdhw,co->bodhw', x,
                                     weight[:, :, kd, kh, kw],
                                     precision=jax.lax.Precision.HIGHEST)
                ref = ref.at[:, :, kd::2, kh::2, kw::2].set(contrib)
    ref = ref + bias[None, :, None, None, None]
    ref = ref * bn_scale[None, :, None, None, None] \
        + bn_shift[None, :, None, None, None]
    ref = jnp.maximum(ref, 0.0)

    # Production (bf16-operand) path: tolerance accounts for bf16 operand and
    # bf16 kernel-output rounding.
    err_bf16 = float(jnp.max(jnp.abs(out - ref)))
    assert err_bf16 < 1e-1, f"bf16 path max abs err {err_bf16}"

    # f32-operand path: locks down the (co,kd,kh,kw) column ordering and the
    # pixel-shuffle independently of bf16 rounding.  Typically ~1e-6; the bound
    # below is conservative w.r.t. MXU f32-matmul internals.
    out_f32 = jax.block_until_ready(jax.jit(upsample3d_block)(x, packed_f32))
    err_f32 = float(jnp.max(jnp.abs(out_f32 - ref)))
    assert err_f32 < 2e-2, f"f32 path max abs err {err_f32}"

    print("KERNEL_OK")
</pallas_src>

<mosaic_0001>
module attributes {stable_mosaic.version = 11 : i64} {
  func.func @_deconv_affine_kernel(%arg0: i32, %arg1: i32, %arg2: memref<1x64x512xf32, #tpu.memory_space<vmem>>, %arg3: memref<256x64xbf16, #tpu.memory_space<vmem>>, %arg4: memref<256x1xf32, #tpu.memory_space<vmem>>, %arg5: memref<256x1xf32, #tpu.memory_space<vmem>>, %arg6: memref<1x256x512xbf16, #tpu.memory_space<vmem>>) attributes {dimension_semantics = [#tpu.dimension_semantics<parallel>, #tpu.dimension_semantics<parallel>], iteration_bounds = array<i64: 2, 1>, scalar_prefetch = 0 : i64, scratch_operands = 0 : i64, tpu.core_type = #tpu.core_type<tc>, window_params = [{transform_indices = @transform_0, window_bounds = array<i64: 1, 64, 512>}, {pipeline_mode = #tpu.pipeline_mode<synchronous>, transform_indices = @transform_1, window_bounds = array<i64: 256, 64>}, {pipeline_mode = #tpu.pipeline_mode<synchronous>, transform_indices = @transform_2, window_bounds = array<i64: 256, 1>}, {pipeline_mode = #tpu.pipeline_mode<synchronous>, transform_indices = @transform_3, window_bounds = array<i64: 256, 1>}, {transform_indices = @transform_4, window_bounds = array<i64: 1, 256, 512>}]} {
    %c0 = arith.constant 0 : index
    %c0_0 = arith.constant 0 : index
    %c0_1 = arith.constant 0 : index
    %0 = vector.load %arg2[%c0, %c0_0, %c0_1] : memref<1x64x512xf32, #tpu.memory_space<vmem>>, vector<1x64x512xf32>
    %1 = vector.shape_cast %0 : vector<1x64x512xf32> to vector<64x512xf32>
    %2 = arith.truncf %1 : vector<64x512xf32> to vector<64x512xbf16>
    %c0_2 = arith.constant 0 : index
    %c0_3 = arith.constant 0 : index
    %3 = vector.load %arg3[%c0_2, %c0_3] : memref<256x64xbf16, #tpu.memory_space<vmem>>, vector<256x64xbf16>
    %cst = arith.constant dense<0.000000e+00> : vector<256x512xf32>
    %4 = tpu.matmul %3, %2, %cst {dimension_numbers = #tpu.dot_dimension_numbers<[1], [0], [0], [1], [0, 0, 1, 1], [], []>} : vector<256x64xbf16>, vector<64x512xbf16>, vector<256x512xf32> -> vector<256x512xf32>
    %c0_4 = arith.constant 0 : index
    %c0_5 = arith.constant 0 : index
    %5 = vector.load %arg4[%c0_4, %c0_5] : memref<256x1xf32, #tpu.memory_space<vmem>>, vector<256x1xf32>
    %6 = vector.broadcast %5 : vector<256x1xf32> to vector<256x512xf32>
    %7 = arith.mulf %4, %6 : vector<256x512xf32>
    %c0_6 = arith.constant 0 : index
    %c0_7 = arith.constant 0 : index
    %8 = vector.load %arg5[%c0_6, %c0_7] : memref<256x1xf32, #tpu.memory_space<vmem>>, vector<256x1xf32>
    %9 = vector.broadcast %8 : vector<256x1xf32> to vector<256x512xf32>
    %10 = arith.addf %7, %9 : vector<256x512xf32>
    %cst_8 = arith.constant 0.000000e+00 : f32
    %11 = vector.broadcast %cst_8 : f32 to vector<256x512xf32>
    %12 = arith.maximumf %10, %11 : vector<256x512xf32>
    %13 = arith.truncf %12 : vector<256x512xf32> to vector<256x512xbf16>
    %c0_9 = arith.constant 0 : index
    %c0_10 = arith.constant 0 : index
    %c0_11 = arith.constant 0 : index
    %14 = vector.load %arg6[%c0_9, %c0_10, %c0_11] : memref<1x256x512xbf16, #tpu.memory_space<vmem>>, vector<1x256x512xbf16>
    %15 = vector.shape_cast %14 : vector<1x256x512xbf16> to vector<256x512xbf16>
    %16 = vector.shape_cast %13 : vector<256x512xbf16> to vector<1x256x512xbf16>
    tpu.vector_store %arg6[%c0_9, %c0_10, %c0_11], %16 {strides = array<i32>} : memref<1x256x512xbf16, #tpu.memory_space<vmem>>, vector<1x256x512xbf16>,
    return
  }
  func.func @transform_0(%arg0: i32, %arg1: i32) -> (i32, i32, i32) {
    %c0_i32 = arith.constant 0 : i32
    %c0_i32_0 = arith.constant 0 : i32
    return %arg0, %c0_i32, %arg1 : i32, i32, i32
  }
  func.func @transform_1(%arg0: i32, %arg1: i32) -> (i32, i32) {
    %c0_i32 = arith.constant 0 : i32
    %c0_i32_0 = arith.constant 0 : i32
    %c0_i32_1 = arith.constant 0 : i32
    return %c0_i32, %c0_i32_0 : i32, i32
  }
  func.func @transform_2(%arg0: i32, %arg1: i32) -> (i32, i32) {
    %c0_i32 = arith.constant 0 : i32
    %c0_i32_0 = arith.constant 0 : i32
    %c0_i32_1 = arith.constant 0 : i32
    return %c0_i32, %c0_i32_0 : i32, i32
  }
  func.func @transform_3(%arg0: i32, %arg1: i32) -> (i32, i32) {
    %c0_i32 = arith.constant 0 : i32
    %c0_i32_0 = arith.constant 0 : i32
    %c0_i32_1 = arith.constant 0 : i32
    return %c0_i32, %c0_i32_0 : i32, i32
  }
  func.func @transform_4(%arg0: i32, %arg1: i32) -> (i32, i32, i32) {
    %c0_i32 = arith.constant 0 : i32
    %c0_i32_0 = arith.constant 0 : i32
    return %arg0, %c0_i32, %arg1 : i32, i32, i32
  }
}

</mosaic_0001>

<llo_original>
// kernel: upsample3d_block.1
$region0: #{upsample3d_block.1}
  #allocation0 [shape = 'u32[]', space=smem, size = 0x4, offset = 0x4, fixed_abs, tag = 'smem constant byte address 0x4 - core index']
  #allocation1 [shape = 'u32[144,128]{1,0:T(1,128)}', space=vmem, size = 0x12000, scoped, tag = 'internal scratch']
  %s0 = inlined_call_operand.vmem [shape: f32[2,64,512], index: 0, kind: input, shape index: {}]
  %s1 = inlined_call_operand.vmem [shape: bf16[256,64], index: 1, kind: input, shape index: {}]
  %s2 = inlined_call_operand.vmem [shape: f32[256,1], index: 2, kind: input, shape index: {}]
  %s3 = inlined_call_operand.vmem [shape: f32[256,1], index: 3, kind: input, shape index: {}]
  %s4 = inlined_call_operand.vmem [shape: bf16[2,256,512], index: 4, kind: output, shape index: {}]
  %s5 = sld [smem:[#allocation0]]
  $region49: #{upsample3d_block.1} parent=0
    _
  %s7 = ssub.s32 1, %s5
  %s8 = scalar_select 0, %s7, %s5
  loop: start=0, step=1, limit=4
  $region2: #{upsample3d_block.1} parent=0 // loop_pre_header
    _
  $region3: #{upsample3d_block.1} parent=0 // loop_header
    %s10 = sphi 0, %s14
    %p11 = scmp.ge.s32.totalorder %s10, 4
    %s17 = sphi 0, %s29
    %s18 = sphi 0, %s25
    %s19 = sphi 0, %s17
    %s20 = sphi 0, %s18
    %s21 = sphi 0, %s19
    %s22 = sphi 0, %s20
    %s34 = sphi 0, %s36
    %s37 = sphi 0, %s34
    %s38 = sphi 0, %s37
    %s54 = sphi 0, %s38
    %s58 = sphi 0, %s58
    %s60 = sphi 0, %s58
    %s61 = sphi 0, %s60
    %s75 = sphi 0, %s61
    %s79 = sphi 0, %s79
    %s81 = sphi 0, %s79
    %s82 = sphi 0, %s81
    %s96 = sphi 0, %s82
    %s100 = sphi 0, %s100
    %s102 = sphi 0, %s100
    %s103 = sphi 0, %s102
    %s117 = sphi 0, %s103
    %s125 = sphi 0, %s127
    %s128 = sphi 0, %s125
    %s129 = sphi 0, %s128
    %s145 = sphi 0, %s129
  $region4: #{upsample3d_block.1} parent=0 // loop_header_branch
    %13 = sbr.rel (%p11) target = $region8
  $region5: #{upsample3d_block.1} parent=0 // loop_body
    %s15 = ssub.s32 %s10, 1
    %s16 = ssub.s32 %s10, 2
    %s23 = sadd.s32 1, %s18
    %p24 = scmp.ge.s32.totalorder %s23, 1
    %s25 = scalar_select %p24, 0, %s23
    %s26 = sadd.s32 1, %s17
    %s27 = scalar_select %p24, %s26, %s17
    %p28 = scmp.ge.s32.totalorder %s27, 2
    %s29 = scalar_select %p28, 0, %s27
    %s30 = ssub.s32 %s17, %s29
    %s31 = ssub.s32 %s18, %s25
    %s32 = sor.u32 %s30, %s31
    %p33 = scmp.eq.s32.totalorder %s32, 0
    %s35 = sadd.s32 %s34, 1
    %s36 = scalar_select %p33, %s34, %s35
    %p39 = pneg %p33
    %p40 = scmp.eq.s32.totalorder %s10, 1
    %p41 = por %p39, %p40
    %p42 = scmp.ne.s32.totalorder %s34, %s37
    %p43 = scmp.eq.s32.totalorder %s10, 0
    %p44 = por %p42, %p43
    %p45 = scmp.ne.s32.totalorder %s34, %s37
    %p46 = scmp.eq.s32.totalorder %s15, 1
    %p47 = por %p45, %p46
    %p48 = scmp.ne.s32.totalorder %s37, %s38
    %p49 = scmp.eq.s32.totalorder %s15, 0
    %p50 = por %p48, %p49
    %p51 = scmp.ne.s32.totalorder %s37, %s38
    %p52 = scmp.eq.s32.totalorder %s16, 1
    %p53 = por %p51, %p52
    %p55 = scmp.ne.s32.totalorder %s38, %s54
    %p56 = scmp.eq.s32.totalorder %s16, 0
    %p57 = por %p55, %p56
    %s59 = sadd.s32 %s58, 1
    %p62 = scmp.eq.s32.totalorder %s10, 1
    %p63 = scmp.ne.s32.totalorder %s58, %s60
    %p64 = scmp.eq.s32.totalorder %s10, 0
    %p65 = por %p63, %p64
    %p66 = scmp.ne.s32.totalorder %s58, %s60
    %p67 = scmp.eq.s32.totalorder %s15, 1
    %p68 = por %p66, %p67
    %p69 = scmp.ne.s32.totalorder %s60, %s61
    %p70 = scmp.eq.s32.totalorder %s15, 0
    %p71 = por %p69, %p70
    %p72 = scmp.ne.s32.totalorder %s60, %s61
    %p73 = scmp.eq.s32.totalorder %s16, 1
    %p74 = por %p72, %p73
    %p76 = scmp.ne.s32.totalorder %s61, %s75
    %p77 = scmp.eq.s32.totalorder %s16, 0
    %p78 = por %p76, %p77
    %s80 = sadd.s32 %s79, 1
    %p83 = scmp.eq.s32.totalorder %s10, 1
    %p84 = scmp.ne.s32.totalorder %s79, %s81
    %p85 = scmp.eq.s32.totalorder %s10, 0
    %p86 = por %p84, %p85
    %p87 = scmp.ne.s32.totalorder %s79, %s81
    %p88 = scmp.eq.s32.totalorder %s15, 1
    %p89 = por %p87, %p88
    %p90 = scmp.ne.s32.totalorder %s81, %s82
    %p91 = scmp.eq.s32.totalorder %s15, 0
    %p92 = por %p90, %p91
    %p93 = scmp.ne.s32.totalorder %s81, %s82
    %p94 = scmp.eq.s32.totalorder %s16, 1
    %p95 = por %p93, %p94
    %p97 = scmp.ne.s32.totalorder %s82, %s96
    %p98 = scmp.eq.s32.totalorder %s16, 0
    %p99 = por %p97, %p98
    %s101 = sadd.s32 %s100, 1
    %p104 = scmp.eq.s32.totalorder %s10, 1
    %p105 = scmp.ne.s32.totalorder %s100, %s102
    %p106 = scmp.eq.s32.totalorder %s10, 0
    %p107 = por %p105, %p106
    %p108 = scmp.ne.s32.totalorder %s100, %s102
    %p109 = scmp.eq.s32.totalorder %s15, 1
    %p110 = por %p108, %p109
    %p111 = scmp.ne.s32.totalorder %s102, %s103
    %p112 = scmp.eq.s32.totalorder %s15, 0
    %p113 = por %p111, %p112
    %p114 = scmp.ne.s32.totalorder %s102, %s103
    %p115 = scmp.eq.s32.totalorder %s16, 1
    %p116 = por %p114, %p115
    %p118 = scmp.ne.s32.totalorder %s103, %s117
    %p119 = scmp.eq.s32.totalorder %s16, 0
    %p120 = por %p118, %p119
    %s121 = ssub.s32 %s17, %s29
    %s122 = ssub.s32 %s18, %s25
    %s123 = sor.u32 %s121, %s122
    %p124 = scmp.eq.s32.totalorder %s123, 0
    %s126 = sadd.s32 %s125, 1
    %s127 = scalar_select %p124, %s125, %s126
    %p130 = pneg %p124
    %p131 = scmp.eq.s32.totalorder %s10, 1
    %p132 = por %p130, %p131
    %p133 = scmp.ne.s32.totalorder %s125, %s128
    %p134 = scmp.eq.s32.totalorder %s10, 0
    %p135 = por %p133, %p134
    %p136 = scmp.ne.s32.totalorder %s125, %s128
    %p137 = scmp.eq.s32.totalorder %s15, 1
    %p138 = por %p136, %p137
    %p139 = scmp.ne.s32.totalorder %s128, %s129
    %p140 = scmp.eq.s32.totalorder %s15, 0
    %p141 = por %p139, %p140
    %p142 = scmp.ne.s32.totalorder %s128, %s129
    %p143 = scmp.eq.s32.totalorder %s16, 1
    %p144 = por %p142, %p143
    %p146 = scmp.ne.s32.totalorder %s129, %s145
    %p147 = scmp.eq.s32.totalorder %s16, 0
    %p148 = por %p146, %p147
    %p149 = scmp.le.s32.totalorder 1, %s10
    %p150 = scmp.lt.s32.totalorder %s10, 3
    %p151 = pnand %p149, %p150
    %p152 = pneg %p151
    // Predicated region
    $region9: #{upsample3d_block.1} parent=5 // pred_check
      _
    $region10: #{upsample3d_block.1} parent=5 // pred_check_branch
      %154 = sbr.rel (%p151) target = $region12
    $region11: #{upsample3d_block.1} parent=5 // pred_region
      %s155 = ssub.s32 %s10, 1
      // Predicated region
      $region13: #{upsample3d_block.1} parent=11 // pred_check
        %p156 = pneg %p71
      $region14: #{upsample3d_block.1} parent=11 // pred_check_branch
        %158 = sbr.rel (%p156) target = $region16
      $region15: #{upsample3d_block.1} parent=11 // pred_region
        _
      $region16: #{upsample3d_block.1} parent=11 // pred_fallthru
        _
      // Predicated region
      $region17: #{upsample3d_block.1} parent=11 // pred_check
        %p159 = pneg %p92
      $region18: #{upsample3d_block.1} parent=11 // pred_check_branch
        %161 = sbr.rel (%p159) target = $region20
      $region19: #{upsample3d_block.1} parent=11 // pred_region
        _
      $region20: #{upsample3d_block.1} parent=11 // pred_fallthru
        _
      // Predicated region
      $region21: #{upsample3d_block.1} parent=11 // pred_check
        %p162 = pneg %p113
      $region22: #{upsample3d_block.1} parent=11 // pred_check_branch
        %164 = sbr.rel (%p162) target = $region24
      $region23: #{upsample3d_block.1} parent=11 // pred_region
        _
      $region24: #{upsample3d_block.1} parent=11 // pred_fallthru
        _
    $region12: #{upsample3d_block.1} parent=5 // pred_fallthru
      _
    %p165 = scmp.lt.s32.totalorder %s10, 2
    // Predicated region
    $region25: #{upsample3d_block.1} parent=5 // pred_check
      %p166 = pneg %p165
    $region26: #{upsample3d_block.1} parent=5 // pred_check_branch
      %168 = sbr.rel (%p166) target = $region28
    $region27: #{upsample3d_block.1} parent=5 // pred_region
      // Predicated region
      $region29: #{upsample3d_block.1} parent=27 // pred_check
        %p169 = pneg %p44
      $region30: #{upsample3d_block.1} parent=27 // pred_check_branch
        %171 = sbr.rel (%p169) target = $region32
      $region31: #{upsample3d_block.1} parent=27 // pred_region
        %s172 = smul.u32 4, %s18
        %p173 = scmp.lt.s32.totalorder %s17, 1
        %s174 = scalar_select %p173, %s17, 1
        %p175 = scmp.lt.s32.totalorder %s172, 3
        %s176 = scalar_select %p175, %s172, 3
        %s177 = smul.addr %s174, 32
        %s178 = sadd.s32 %s176, %s177
        %s179 = smul.addr %s178, 8
        %s180 = scalar_lea.vmem %s0, %s179
        %s181 = smul.u32 4, %s18
      $region32: #{upsample3d_block.1} parent=27 // pred_fallthru
        _
    $region28: #{upsample3d_block.1} parent=5 // pred_fallthru
      _
    %p182 = scmp.le.s32.totalorder 1, %s10
    %p183 = scmp.lt.s32.totalorder %s10, 3
    %p184 = pnand %p182, %p183
    %p185 = pneg %p184
    // Predicated region
    $region33: #{upsample3d_block.1} parent=5 // pred_check
      _
    $region34: #{upsample3d_block.1} parent=5 // pred_check_branch
      %187 = sbr.rel (%p184) target = $region36
    $region35: #{upsample3d_block.1} parent=5 // pred_region
      %s188 = ssub.s32 %s10, 1
      %s189 = smul.u32 4, %s20
      %p190 = scmp.lt.s32.totalorder %s19, 1
      %s191 = scalar_select %p190, %s19, 1
      %p192 = scmp.lt.s32.totalorder %s189, 3
      %s193 = scalar_select %p192, %s189, 3
      %s194 = smul.addr %s191, 32
      %s195 = sadd.s32 %s193, %s194
      %s196 = smul.addr %s195, 8
      %s197 = scalar_lea.vmem %s0, %s196
      %p198 = pneg %p50
      %p199 = pneg %p47
      %p200 = pneg %p71
      %p201 = pneg %p68
      %p202 = pneg %p92
      %p203 = pneg %p89
      %p204 = pneg %p113
      %p205 = pneg %p110
      %p206 = pneg %p141
      %p207 = pneg %p138
      %s208 = smul.u32 4, %s20
      %p209 = scmp.lt.s32.totalorder %s19, 1
      %s210 = scalar_select %p209, %s19, 1
      %p211 = scmp.lt.s32.totalorder %s208, 3
      %s212 = scalar_select %p211, %s208, 3
      %s213 = smul.addr %s210, 128
      %s214 = sadd.s32 %s212, %s213
      %s215 = smul.addr %s214, 4
      %s216 = scalar_lea.vmem %s4, %s215
      %s217 = smul.u32 4, %s20
      %p218 = scmp.lt.s32.totalorder %s19, 1
      %s219 = scalar_select %p218, %s19, 1
      %p220 = scmp.lt.s32.totalorder %s217, 3
      %s221 = scalar_select %p220, %s217, 3
      %s222 = smul.addr %s219, 32
      %s223 = sadd.s32 %s221, %s222
      %s224 = smul.addr %s223, 8
      %s225 = scalar_lea.vmem %s0, %s224
      %s226 = smul.u32 4, %s20
      %s227 = smul.u32 4, %s20
      %p228 = scmp.lt.s32.totalorder %s19, 1
      %s229 = scalar_select %p228, %s19, 1
      %p230 = scmp.lt.s32.totalorder %s227, 3
      %s231 = scalar_select %p230, %s227, 3
      %s232 = smul.addr %s229, 128
      %s233 = sadd.s32 %s231, %s232
      %s234 = smul.addr %s233, 4
      %s235 = scalar_lea.vmem %s4, %s234
      %s236 = smul.u32 4, %s20
      %v238 = vld [vmem:[%s225] sm:$0xff]
      %v239 = vld [vmem:[%s225 + $0x8] sm:$0xff]
      %v240 = vld [vmem:[%s225 + $0x10] sm:$0xff]
      %v241 = vld [vmem:[%s225 + $0x18] sm:$0xff]
      %v242 = vld [vmem:[%s225 + $0x20] sm:$0xff]
      %v243 = vld [vmem:[%s225 + $0x28] sm:$0xff]
      %v244 = vld [vmem:[%s225 + $0x30] sm:$0xff]
      %v245 = vld [vmem:[%s225 + $0x38] sm:$0xff]
      %v246 = vld [vmem:[%s225 + $0x40] sm:$0xff]
      %v247 = vld [vmem:[%s225 + $0x48] sm:$0xff]
      %v248 = vld [vmem:[%s225 + $0x50] sm:$0xff]
      %v249 = vld [vmem:[%s225 + $0x58] sm:$0xff]
      %v250 = vld [vmem:[%s225 + $0x60] sm:$0xff]
      %v251 = vld [vmem:[%s225 + $0x68] sm:$0xff]
      %v252 = vld [vmem:[%s225 + $0x70] sm:$0xff]
      %v253 = vld [vmem:[%s225 + $0x78] sm:$0xff]
      %v254 = vld [vmem:[%s225 + $0x80] sm:$0xff]
      %v255 = vld [vmem:[%s225 + $0x88] sm:$0xff]
      %v256 = vld [vmem:[%s225 + $0x90] sm:$0xff]
      %v257 = vld [vmem:[%s225 + $0x98] sm:$0xff]
      %v258 = vld [vmem:[%s225 + $0xa0] sm:$0xff]
      %v259 = vld [vmem:[%s225 + $0xa8] sm:$0xff]
      %v260 = vld [vmem:[%s225 + $0xb0] sm:$0xff]
      %v261 = vld [vmem:[%s225 + $0xb8] sm:$0xff]
      %v262 = vld [vmem:[%s225 + $0xc0] sm:$0xff]
      %v263 = vld [vmem:[%s225 + $0xc8] sm:$0xff]
      %v264 = vld [vmem:[%s225 + $0xd0] sm:$0xff]
      %v265 = vld [vmem:[%s225 + $0xd8] sm:$0xff]
      %v266 = vld [vmem:[%s225 + $0xe0] sm:$0xff]
      %v267 = vld [vmem:[%s225 + $0xe8] sm:$0xff]
      %v268 = vld [vmem:[%s225 + $0xf0] sm:$0xff]
      %v269 = vld [vmem:[%s225 + $0xf8] sm:$0xff]
      %v270 = vpack.c.bf16 %v242, %v238
      %v271 = vpack.c.bf16 %v243, %v239
      %v272 = vpack.c.bf16 %v244, %v240
      %v273 = vpack.c.bf16 %v245, %v241
      %v274 = vpack.c.bf16 %v250, %v246
      %v275 = vpack.c.bf16 %v251, %v247
      %v276 = vpack.c.bf16 %v252, %v248
      %v277 = vpack.c.bf16 %v253, %v249
      %v278 = vpack.c.bf16 %v258, %v254
      %v279 = vpack.c.bf16 %v259, %v255
      %v280 = vpack.c.bf16 %v260, %v256
      %v281 = vpack.c.bf16 %v261, %v257
      %v282 = vpack.c.bf16 %v266, %v262
      %v283 = vpack.c.bf16 %v267, %v263
      %v284 = vpack.c.bf16 %v268, %v264
      %v285 = vpack.c.bf16 %v269, %v265
      %v286 = vld [vmem:[%s1] sm:$0xf]
      %v287 = vld [vmem:[%s1 + $0x4] sm:$0xf]
      %v288 = vld [vmem:[%s1 + $0x8] sm:$0xf]
      %v289 = vld [vmem:[%s1 + $0xc] sm:$0xf]
      %v290 = vld [vmem:[%s1 + $0x10] sm:$0xf]
      %v291 = vld [vmem:[%s1 + $0x14] sm:$0xf]
      %v292 = vld [vmem:[%s1 + $0x18] sm:$0xf]
      %v293 = vld [vmem:[%s1 + $0x1c] sm:$0xf]
      %v294 = vld [vmem:[%s1 + $0x20] sm:$0xf]
      %v295 = vld [vmem:[%s1 + $0x24] sm:$0xf]
      %v296 = vld [vmem:[%s1 + $0x28] sm:$0xf]
      %v297 = vld [vmem:[%s1 + $0x2c] sm:$0xf]
      %v298 = vld [vmem:[%s1 + $0x30] sm:$0xf]
      %v299 = vld [vmem:[%s1 + $0x34] sm:$0xf]
      %v300 = vld [vmem:[%s1 + $0x38] sm:$0xf]
      %v301 = vld [vmem:[%s1 + $0x3c] sm:$0xf]
      %v302 = vld [vmem:[%s1 + $0x40] sm:$0xf]
      %v303 = vld [vmem:[%s1 + $0x44] sm:$0xf]
      %v304 = vld [vmem:[%s1 + $0x48] sm:$0xf]
      %v305 = vld [vmem:[%s1 + $0x4c] sm:$0xf]
      %v306 = vld [vmem:[%s1 + $0x50] sm:$0xf]
      %v307 = vld [vmem:[%s1 + $0x54] sm:$0xf]
      %v308 = vld [vmem:[%s1 + $0x58] sm:$0xf]
      %v309 = vld [vmem:[%s1 + $0x5c] sm:$0xf]
      %v310 = vld [vmem:[%s1 + $0x60] sm:$0xf]
      %v311 = vld [vmem:[%s1 + $0x64] sm:$0xf]
      %v312 = vld [vmem:[%s1 + $0x68] sm:$0xf]
      %v313 = vld [vmem:[%s1 + $0x6c] sm:$0xf]
      %v314 = vld [vmem:[%s1 + $0x70] sm:$0xf]
      %v315 = vld [vmem:[%s1 + $0x74] sm:$0xf]
      %v316 = vld [vmem:[%s1 + $0x78] sm:$0xf]
      %v317 = vld [vmem:[%s1 + $0x7c] sm:$0xf]
      %v350 = vunpack.c.l.b16 %v286
      %v351 = vunpack.c.l.b16 %v287
      %v352 = vunpack.c.l.b16 %v288
      %v353 = vunpack.c.l.b16 %v289
      %v354 = vunpack.c.l.b16 %v290
      %v355 = vunpack.c.l.b16 %v291
      %v356 = vunpack.c.l.b16 %v292
      %v357 = vunpack.c.l.b16 %v293
      %v358 = vunpack.c.l.b16 %v294
      %v359 = vunpack.c.l.b16 %v295
      %v360 = vunpack.c.l.b16 %v296
      %v361 = vunpack.c.l.b16 %v297
      %v362 = vunpack.c.l.b16 %v298
      %v363 = vunpack.c.l.b16 %v299
      %v364 = vunpack.c.l.b16 %v300
      %v365 = vunpack.c.l.b16 %v301
      %v366 = vunpack.c.l.b16 %v302
      %v367 = vunpack.c.l.b16 %v303
      %v368 = vunpack.c.l.b16 %v304
      %v369 = vunpack.c.l.b16 %v305
      %v370 = vunpack.c.l.b16 %v306
      %v371 = vunpack.c.l.b16 %v307
      %v372 = vunpack.c.l.b16 %v308
      %v373 = vunpack.c.l.b16 %v309
      %v374 = vunpack.c.l.b16 %v310
      %v375 = vunpack.c.l.b16 %v311
      %v376 = vunpack.c.l.b16 %v312
      %v377 = vunpack.c.l.b16 %v313
      %v378 = vunpack.c.l.b16 %v314
      %v379 = vunpack.c.l.b16 %v315
      %v380 = vunpack.c.l.b16 %v316
      %v381 = vunpack.c.l.b16 %v317
      %v382 = vpack.c.b16 %v351, %v350
      %v383 = vpack.c.b16 %v353, %v352
      %v384 = vpack.c.b16 %v355, %v354
      %v385 = vpack.c.b16 %v357, %v356
      %v386 = vpack.c.b16 %v359, %v358
      %v387 = vpack.c.b16 %v361, %v360
      %v388 = vpack.c.b16 %v363, %v362
      %v389 = vpack.c.b16 %v365, %v364
      %v390 = vpack.c.b16 %v367, %v366
      %v391 = vpack.c.b16 %v369, %v368
      %v392 = vpack.c.b16 %v371, %v370
      %v393 = vpack.c.b16 %v373, %v372
      %v394 = vpack.c.b16 %v375, %v374
      %v395 = vpack.c.b16 %v377, %v376
      %v396 = vpack.c.b16 %v379, %v378
      %v397 = vpack.c.b16 %v381, %v380
      %vm398 = vcmask 523264
      %v400 = vsel %vm398, %v382, 0
      %v403 = vsel %vm398, %v383, 0
      %v406 = vsel %vm398, %v384, 0
      %v409 = vsel %vm398, %v385, 0
      %v412 = vsel %vm398, %v386, 0
      %v415 = vsel %vm398, %v387, 0
      %v418 = vsel %vm398, %v388, 0
      %v421 = vsel %vm398, %v389, 0
      %v424 = vsel %vm398, %v390, 0
      %v427 = vsel %vm398, %v391, 0
      %v430 = vsel %vm398, %v392, 0
      %v433 = vsel %vm398, %v393, 0
      %v436 = vsel %vm398, %v394, 0
      %v439 = vsel %vm398, %v395, 0
      %v442 = vsel %vm398, %v396, 0
      %v445 = vsel %vm398, %v397, 0
      %447 = vmatprep.subr.bf16.mxu0 %v271
      %448 = vmatpush1.bf16.msra.mxu0 %v270
      %449 = vmatprep.subr.bf16.mxu0 %v275
      %450 = vmatpush1.bf16.msra.mxu0 %v274
      %451 = vmatprep.subr.bf16.mxu0 %v279
      %452 = vmatpush1.bf16.msra.mxu0 %v278
      %453 = vmatprep.subr.bf16.mxu0 %v283
      %454 = vmatpush1.bf16.msra.mxu0 %v282
      %455 = vmatprep.subr.bf16.mxu0 0
      %456 = vmatpush1.bf16.msra.mxu0 0
      %457 = vmatprep.subr.bf16.mxu0 0
      %458 = vmatpush1.bf16.msra.mxu0 0
      %459 = vmatprep.subr.bf16.mxu0 0
      %460 = vmatpush1.bf16.msra.mxu0 0
      %461 = vmatprep.subr.bf16.mxu0 0
      %462 = vmatpush1.bf16.msra.mxu0 0
      %463 = vmatprep.subr.bf16.mxu0 0
      %464 = vmatpush1.bf16.msra.mxu0 0
      %465 = vmatprep.subr.bf16.mxu0 0
      %466 = vmatpush1.bf16.msra.mxu0 0
      %467 = vmatprep.subr.bf16.mxu0 0
      %468 = vmatpush1.bf16.msra.mxu0 0
      %469 = vmatprep.subr.bf16.mxu0 0
      %470 = vmatpush1.bf16.msra.mxu0 0
      %471 = vmatprep.subr.bf16.mxu0 0
      %472 = vmatpush1.bf16.msra.mxu0 0
      %473 = vmatprep.subr.bf16.mxu0 0
      %474 = vmatpush1.bf16.msra.mxu0 0
      %475 = vmatprep.subr.bf16.mxu0 0
      %476 = vmatpush1.bf16.msra.mxu0 0
      %477 = vmatprep.subr.bf16.mxu0 0
      %478 = vmatpush1.bf16.msra.mxu0 0
      %479 = vmatprep.mubr.bf16.mxu0 0
      %480 = vmatmul.mubr.bf16.gmra.mrb[0].mxu0 %v400
      %v481 = vpop.f32.mrb[0].mxu0
      %v482 = vadd.f32 0.0, %v481
      %v483 = vpop.f32.mrb[0].mxu0
      %v484 = vadd.f32 0.0, %v483
      %v485 = vpop.f32.mrb[0].mxu0
      %v486 = vadd.f32 0.0, %v485
      %v487 = vpop.f32.mrb[0].mxu0
      %v488 = vadd.f32 0.0, %v487
      %489 = vmatprep.mubr.bf16.mxu0 0
      %490 = vmatmul.mubr.bf16.gmra.mrb[0].mxu0 %v403
      %v491 = vpop.f32.mrb[0].mxu0
      %v492 = vadd.f32 0.0, %v491
      %v493 = vpop.f32.mrb[0].mxu0
      %v494 = vadd.f32 0.0, %v493
      %v495 = vpop.f32.mrb[0].mxu0
      %v496 = vadd.f32 0.0, %v495
      %v497 = vpop.f32.mrb[0].mxu0
      %v498 = vadd.f32 0.0, %v497
      %499 = vmatprep.mubr.bf16.mxu0 0
      %500 = vmatmul.mubr.bf16.gmra.mrb[0].mxu0 %v406
      %v501 = vpop.f32.mrb[0].mxu0
      %v502 = vadd.f32 0.0, %v501
      %v503 = vpop.f32.mrb[0].mxu0
      %v504 = vadd.f32 0.0, %v503
      %v505 = vpop.f32.mrb[0].mxu0
      %v506 = vadd.f32 0.0, %v505
      %v507 = vpop.f32.mrb[0].mxu0
      %v508 = vadd.f32 0.0, %v507
      %509 = vmatprep.mubr.bf16.mxu0 0
      %510 = vmatmul.mubr.bf16.gmra.mrb[0].mxu0 %v409
      %v511 = vpop.f32.mrb[0].mxu0
      %v512 = vadd.f32 0.0, %v511
      %v513 = vpop.f32.mrb[0].mxu0
      %v514 = vadd.f32 0.0, %v513
      %v515 = vpop.f32.mrb[0].mxu0
      %v516 = vadd.f32 0.0, %v515
      %v517 = vpop.f32.mrb[0].mxu0
      %v518 = vadd.f32 0.0, %v517
      %519 = vmatprep.mubr.bf16.mxu0 0
      %520 = vmatmul.mubr.bf16.gmra.mrb[0].mxu0 %v412
      %v521 = vpop.f32.mrb[0].mxu0
      %v522 = vadd.f32 0.0, %v521
      %v523 = vpop.f32.mrb[0].mxu0
      %v524 = vadd.f32 0.0, %v523
      %v525 = vpop.f32.mrb[0].mxu0
      %v526 = vadd.f32 0.0, %v525
      %v527 = vpop.f32.mrb[0].mxu0
      %v528 = vadd.f32 0.0, %v527
      %529 = vmatprep.mubr.bf16.mxu0 0
      %530 = vmatmul.mubr.bf16.gmra.mrb[0].mxu0 %v415
      %v531 = vpop.f32.mrb[0].mxu0
      %v532 = vadd.f32 0.0, %v531
      %v533 = vpop.f32.mrb[0].mxu0
      %v534 = vadd.f32 0.0, %v533
      %v535 = vpop.f32.mrb[0].mxu0
      %v536 = vadd.f32 0.0, %v535
      %v537 = vpop.f32.mrb[0].mxu0
      %v538 = vadd.f32 0.0, %v537
      %539 = vmatprep.mubr.bf16.mxu0 0
      %540 = vmatmul.mubr.bf16.gmra.mrb[0].mxu0 %v418
      %v541 = vpop.f32.mrb[0].mxu0
      %v542 = vadd.f32 0.0, %v541
      %v543 = vpop.f32.mrb[0].mxu0
      %v544 = vadd.f32 0.0, %v543
      %v545 = vpop.f32.mrb[0].mxu0
      %v546 = vadd.f32 0.0, %v545
      %v547 = vpop.f32.mrb[0].mxu0
      %v548 = vadd.f32 0.0, %v547
      %549 = vmatprep.mubr.bf16.mxu0 0
      %550 = vmatmul.mubr.bf16.gmra.mrb[0].mxu0 %v421
      %v551 = vpop.f32.mrb[0].mxu0
      %v552 = vadd.f32 0.0, %v551
      %v553 = vpop.f32.mrb[0].mxu0
      %v554 = vadd.f32 0.0, %v553
      %v555 = vpop.f32.mrb[0].mxu0
      %v556 = vadd.f32 0.0, %v555
      %v557 = vpop.f32.mrb[0].mxu0
      %v558 = vadd.f32 0.0, %v557
      %559 = vmatprep.mubr.bf16.mxu0 0
      %560 = vmatmul.mubr.bf16.gmra.mrb[0].mxu0 %v424
      %v561 = vpop.f32.mrb[0].mxu0
      %v562 = vadd.f32 0.0, %v561
      %v563 = vpop.f32.mrb[0].mxu0
      %v564 = vadd.f32 0.0, %v563
      %v565 = vpop.f32.mrb[0].mxu0
      %v566 = vadd.f32 0.0, %v565
      %v567 = vpop.f32.mrb[0].mxu0
      %v568 = vadd.f32 0.0, %v567
      %569 = vmatprep.mubr.bf16.mxu0 0
      %570 = vmatmul.mubr.bf16.gmra.mrb[0].mxu0 %v427
      %v571 = vpop.f32.mrb[0].mxu0
      %v572 = vadd.f32 0.0, %v571
      %v573 = vpop.f32.mrb[0].mxu0
      %v574 = vadd.f32 0.0, %v573
      %v575 = vpop.f32.mrb[0].mxu0
      %v576 = vadd.f32 0.0, %v575
      %v577 = vpop.f32.mrb[0].mxu0
      %v578 = vadd.f32 0.0, %v577
      %579 = vmatprep.mubr.bf16.mxu0 0
      %580 = vmatmul.mubr.bf16.gmra.mrb[0].mxu0 %v430
      %v581 = vpop.f32.mrb[0].mxu0
      %v582 = vadd.f32 0.0, %v581
      %v583 = vpop.f32.mrb[0].mxu0
      %v584 = vadd.f32 0.0, %v583
      %v585 = vpop.f32.mrb[0].mxu0
      %v586 = vadd.f32 0.0, %v585
      %v587 = vpop.f32.mrb[0].mxu0
      %v588 = vadd.f32 0.0, %v587
      %589 = vmatprep.mubr.bf16.mxu0 0
      %590 = vmatmul.mubr.bf16.gmra.mrb[0].mxu0 %v433
      %v591 = vpop.f32.mrb[0].mxu0
      %v592 = vadd.f32 0.0, %v591
      %v593 = vpop.f32.mrb[0].mxu0
      %v594 = vadd.f32 0.0, %v593
      %v595 = vpop.f32.mrb[0].mxu0
      %v596 = vadd.f32 0.0, %v595
      %v597 = vpop.f32.mrb[0].mxu0
      %v598 = vadd.f32 0.0, %v597
      %599 = vmatprep.mubr.bf16.mxu0 0
      %600 = vmatmul.mubr.bf16.gmra.mrb[0].mxu0 %v436
      %v601 = vpop.f32.mrb[0].mxu0
      %v602 = vadd.f32 0.0, %v601
      %v603 = vpop.f32.mrb[0].mxu0
      %v604 = vadd.f32 0.0, %v603
      %v605 = vpop.f32.mrb[0].mxu0
      %v606 = vadd.f32 0.0, %v605
      %v607 = vpop.f32.mrb[0].mxu0
      %v608 = vadd.f32 0.0, %v607
      %609 = vmatprep.mubr.bf16.mxu0 0
      %610 = vmatmul.mubr.bf16.gmra.mrb[0].mxu0 %v439
      %v611 = vpop.f32.mrb[0].mxu0
      %v612 = vadd.f32 0.0, %v611
      %v613 = vpop.f32.mrb[0].mxu0
      %v614 = vadd.f32 0.0, %v613
      %v615 = vpop.f32.mrb[0].mxu0
      %v616 = vadd.f32 0.0, %v615
      %v617 = vpop.f32.mrb[0].mxu0
      %v618 = vadd.f32 0.0, %v617
      %619 = vmatprep.mubr.bf16.mxu0 0
      %620 = vmatmul.mubr.bf16.gmra.mrb[0].mxu0 %v442
      %v621 = vpop.f32.mrb[0].mxu0
      %v622 = vadd.f32 0.0, %v621
      %v623 = vpop.f32.mrb[0].mxu0
      %v624 = vadd.f32 0.0, %v623
      %v625 = vpop.f32.mrb[0].mxu0
      %v626 = vadd.f32 0.0, %v625
      %v627 = vpop.f32.mrb[0].mxu0
      %v628 = vadd.f32 0.0, %v627
      %629 = vmatprep.mubr.bf16.mxu0 0
      %630 = vmatmul.mubr.bf16.gmra.mrb[0].mxu0 %v445
      %v631 = vpop.f32.mrb[0].mxu0
      %v632 = vadd.f32 0.0, %v631
      %v633 = vpop.f32.mrb[0].mxu0
      %v634 = vadd.f32 0.0, %v633
      %v635 = vpop.f32.mrb[0].mxu0
      %v636 = vadd.f32 0.0, %v635
      %v637 = vpop.f32.mrb[0].mxu0
      %v638 = vadd.f32 0.0, %v637
      %639 = vdwg.mxu0
      %640 = vmatprep.subr.bf16.mxu0 %v273
      %641 = vmatpush1.bf16.msra.mxu0 %v272
      %642 = vmatprep.subr.bf16.mxu0 %v277
      %643 = vmatpush1.bf16.msra.mxu0 %v276
      %644 = vmatprep.subr.bf16.mxu0 %v281
      %645 = vmatpush1.bf16.msra.mxu0 %v280
      %646 = vmatprep.subr.bf16.mxu0 %v285
      %647 = vmatpush1.bf16.msra.mxu0 %v284
      %648 = vmatprep.subr.bf16.mxu0 0
      %649 = vmatpush1.bf16.msra.mxu0 0
      %650 = vmatprep.subr.bf16.mxu0 0
      %651 = vmatpush1.bf16.msra.mxu0 0
      %652 = vmatprep.subr.bf16.mxu0 0
      %653 = vmatpush1.bf16.msra.mxu0 0
      %654 = vmatprep.subr.bf16.mxu0 0
      %655 = vmatpush1.bf16.msra.mxu0 0
      %656 = vmatprep.subr.bf16.mxu0 0
      %657 = vmatpush1.bf16.msra.mxu0 0
      %658 = vmatprep.subr.bf16.mxu0 0
      %659 = vmatpush1.bf16.msra.mxu0 0
      %660 = vmatprep.subr.bf16.mxu0 0
      %661 = vmatpush1.bf16.msra.mxu0 0
      %662 = vmatprep.subr.bf16.mxu0 0
      %663 = vmatpush1.bf16.msra.mxu0 0
      %664 = vmatprep.subr.bf16.mxu0 0
      %665 = vmatpush1.bf16.msra.mxu0 0
      %666 = vmatprep.subr.bf16.mxu0 0
      %667 = vmatpush1.bf16.msra.mxu0 0
      %668 = vmatprep.subr.bf16.mxu0 0
      %669 = vmatpush1.bf16.msra.mxu0 0
      %670 = vmatprep.subr.bf16.mxu0 0
      %671 = vmatpush1.bf16.msra.mxu0 0
      %672 = vmatprep.mubr.bf16.mxu0 0
      %673 = vmatmul.mubr.bf16.gmra.mrb[0].mxu0 %v400
      %v674 = vpop.f32.mrb[0].mxu0
      %v675 = vadd.f32 0.0, %v674
      %v676 = vpop.f32.mrb[0].mxu0
      %v677 = vadd.f32 0.0, %v676
      %v678 = vpop.f32.mrb[0].mxu0
      %v679 = vadd.f32 0.0, %v678
      %v680 = vpop.f32.mrb[0].mxu0
      %v681 = vadd.f32 0.0, %v680
      %682 = vmatprep.mubr.bf16.mxu0 0
      %683 = vmatmul.mubr.bf16.gmra.mrb[0].mxu0 %v403
      %v684 = vpop.f32.mrb[0].mxu0
      %v685 = vadd.f32 0.0, %v684
      %v686 = vpop.f32.mrb[0].mxu0
      %v687 = vadd.f32 0.0, %v686
      %v688 = vpop.f32.mrb[0].mxu0
      %v689 = vadd.f32 0.0, %v688
      %v690 = vpop.f32.mrb[0].mxu0
      %v691 = vadd.f32 0.0, %v690
      %692 = vmatprep.mubr.bf16.mxu0 0
      %693 = vmatmul.mubr.bf16.gmra.mrb[0].mxu0 %v406
      %v694 = vpop.f32.mrb[0].mxu0
      %v695 = vadd.f32 0.0, %v694
      %v696 = vpop.f32.mrb[0].mxu0
      %v697 = vadd.f32 0.0, %v696
      %v698 = vpop.f32.mrb[0].mxu0
      %v699 = vadd.f32 0.0, %v698
      %v700 = vpop.f32.mrb[0].mxu0
      %v701 = vadd.f32 0.0, %v700
      %702 = vmatprep.mubr.bf16.mxu0 0
      %703 = vmatmul.mubr.bf16.gmra.mrb[0].mxu0 %v409
      %v704 = vpop.f32.mrb[0].mxu0
      %v705 = vadd.f32 0.0, %v704
      %v706 = vpop.f32.mrb[0].mxu0
      %v707 = vadd.f32 0.0, %v706
      %v708 = vpop.f32.mrb[0].mxu0
      %v709 = vadd.f32 0.0, %v708
      %v710 = vpop.f32.mrb[0].mxu0
      %v711 = vadd.f32 0.0, %v710
      %712 = vmatprep.mubr.bf16.mxu0 0
      %713 = vmatmul.mubr.bf16.gmra.mrb[0].mxu0 %v412
      %v714 = vpop.f32.mrb[0].mxu0
      %v715 = vadd.f32 0.0, %v714
      %v716 = vpop.f32.mrb[0].mxu0
      %v717 = vadd.f32 0.0, %v716
      %v718 = vpop.f32.mrb[0].mxu0
      %v719 = vadd.f32 0.0, %v718
      %v720 = vpop.f32.mrb[0].mxu0
      %v721 = vadd.f32 0.0, %v720
      %722 = vmatprep.mubr.bf16.mxu0 0
      %723 = vmatmul.mubr.bf16.gmra.mrb[0].mxu0 %v415
      %v724 = vpop.f32.mrb[0].mxu0
      %v725 = vadd.f32 0.0, %v724
      %v726 = vpop.f32.mrb[0].mxu0
      %v727 = vadd.f32 0.0, %v726
      %v728 = vpop.f32.mrb[0].mxu0
      %v729 = vadd.f32 0.0, %v728
      %v730 = vpop.f32.mrb[0].mxu0
      %v731 = vadd.f32 0.0, %v730
      %732 = vmatprep.mubr.bf16.mxu0 0
      %733 = vmatmul.mubr.bf16.gmra.mrb[0].mxu0 %v418
      %v734 = vpop.f32.mrb[0].mxu0
      %v735 = vadd.f32 0.0, %v734
      %v736 = vpop.f32.mrb[0].mxu0
      %v737 = vadd.f32 0.0, %v736
      %v738 = vpop.f32.mrb[0].mxu0
      %v739 = vadd.f32 0.0, %v738
      %v740 = vpop.f32.mrb[0].mxu0
      %v741 = vadd.f32 0.0, %v740
      %742 = vmatprep.mubr.bf16.mxu0 0
      %743 = vmatmul.mubr.bf16.gmra.mrb[0].mxu0 %v421
      %v744 = vpop.f32.mrb[0].mxu0
      %v745 = vadd.f32 0.0, %v744
      %v746 = vpop.f32.mrb[0].mxu0
      %v747 = vadd.f32 0.0, %v746
      %v748 = vpop.f32.mrb[0].mxu0
      %v749 = vadd.f32 0.0, %v748
      %v750 = vpop.f32.mrb[0].mxu0
      %v751 = vadd.f32 0.0, %v750
      %752 = vmatprep.mubr.bf16.mxu0 0
      %753 = vmatmul.mubr.bf16.gmra.mrb[0].mxu0 %v424
      %v754 = vpop.f32.mrb[0].mxu0
      %v755 = vadd.f32 0.0, %v754
      %v756 = vpop.f32.mrb[0].mxu0
      %v757 = vadd.f32 0.0, %v756
      %v758 = vpop.f32.mrb[0].mxu0
      %v759 = vadd.f32 0.0, %v758
      %v760 = vpop.f32.mrb[0].mxu0
      %v761 = vadd.f32 0.0, %v760
      %762 = vmatprep.mubr.bf16.mxu0 0
      %763 = vmatmul.mubr.bf16.gmra.mrb[0].mxu0 %v427
      %v764 = vpop.f32.mrb[0].mxu0
      %v765 = vadd.f32 0.0, %v764
      %v766 = vpop.f32.mrb[0].mxu0
      %v767 = vadd.f32 0.0, %v766
      %v768 = vpop.f32.mrb[0].mxu0
      %v769 = vadd.f32 0.0, %v768
      %v770 = vpop.f32.mrb[0].mxu0
      %v771 = vadd.f32 0.0, %v770
      %772 = vmatprep.mubr.bf16.mxu0 0
      %773 = vmatmul.mubr.bf16.gmra.mrb[0].mxu0 %v430
      %v774 = vpop.f32.mrb[0].mxu0
      %v775 = vadd.f32 0.0, %v774
      %v776 = vpop.f32.mrb[0].mxu0
      %v777 = vadd.f32 0.0, %v776
      %v778 = vpop.f32.mrb[0].mxu0
      %v779 = vadd.f32 0.0, %v778
      %v780 = vpop.f32.mrb[0].mxu0
      %v781 = vadd.f32 0.0, %v780
      %782 = vmatprep.mubr.bf16.mxu0 0
      %783 = vmatmul.mubr.bf16.gmra.mrb[0].mxu0 %v433
      %v784 = vpop.f32.mrb[0].mxu0
      %v785 = vadd.f32 0.0, %v784
      %v786 = vpop.f32.mrb[0].mxu0
      %v787 = vadd.f32 0.0, %v786
      %v788 = vpop.f32.mrb[0].mxu0
      %v789 = vadd.f32 0.0, %v788
      %v790 = vpop.f32.mrb[0].mxu0
      %v791 = vadd.f32 0.0, %v790
      %792 = vmatprep.mubr.bf16.mxu0 0
      %793 = vmatmul.mubr.bf16.gmra.mrb[0].mxu0 %v436
      %v794 = vpop.f32.mrb[0].mxu0
      %v795 = vadd.f32 0.0, %v794
      %v796 = vpop.f32.mrb[0].mxu0
      %v797 = vadd.f32 0.0, %v796
      %v798 = vpop.f32.mrb[0].mxu0
      %v799 = vadd.f32 0.0, %v798
      %v800 = vpop.f32.mrb[0].mxu0
      %v801 = vadd.f32 0.0, %v800
      %802 = vmatprep.mubr.bf16.mxu0 0
      %803 = vmatmul.mubr.bf16.gmra.mrb[0].mxu0 %v439
      %v804 = vpop.f32.mrb[0].mxu0
      %v805 = vadd.f32 0.0, %v804
      %v806 = vpop.f32.mrb[0].mxu0
      %v807 = vadd.f32 0.0, %v806
      %v808 = vpop.f32.mrb[0].mxu0
      %v809 = vadd.f32 0.0, %v808
      %v810 = vpop.f32.mrb[0].mxu0
      %v811 = vadd.f32 0.0, %v810
      %812 = vmatprep.mubr.bf16.mxu0 0
      %813 = vmatmul.mubr.bf16.gmra.mrb[0].mxu0 %v442
      %v814 = vpop.f32.mrb[0].mxu0
      %v815 = vadd.f32 0.0, %v814
      %v816 = vpop.f32.mrb[0].mxu0
      %v817 = vadd.f32 0.0, %v816
      %v818 = vpop.f32.mrb[0].mxu0
      %v819 = vadd.f32 0.0, %v818
      %v820 = vpop.f32.mrb[0].mxu0
      %v821 = vadd.f32 0.0, %v820
      %822 = vmatprep.mubr.bf16.mxu0 0
      %823 = vmatmul.mubr.bf16.gmra.mrb[0].mxu0 %v445
      %v824 = vpop.f32.mrb[0].mxu0
      %v825 = vadd.f32 0.0, %v824
      %v826 = vpop.f32.mrb[0].mxu0
      %v827 = vadd.f32 0.0, %v826
      %v828 = vpop.f32.mrb[0].mxu0
      %v829 = vadd.f32 0.0, %v828
      %v830 = vpop.f32.mrb[0].mxu0
      %v831 = vadd.f32 0.0, %v830
      %832 = vdwg.mxu0
      %v833 = vld [vmem:[%s2] sm:$0xff]
      %v834 = vld [vmem:[%s2 + $0x8] sm:$0xff]
      %v835 = vld [vmem:[%s2 + $0x10] sm:$0xff]
      %v836 = vld [vmem:[%s2 + $0x18] sm:$0xff]
      %v837 = vld [vmem:[%s2 + $0x20] sm:$0xff]
      %v838 = vld [vmem:[%s2 + $0x28] sm:$0xff]
      %v839 = vld [vmem:[%s2 + $0x30] sm:$0xff]
      %v840 = vld [vmem:[%s2 + $0x38] sm:$0xff]
      %v841 = vld [vmem:[%s2 + $0x40] sm:$0xff]
      %v842 = vld [vmem:[%s2 + $0x48] sm:$0xff]
      %v843 = vld [vmem:[%s2 + $0x50] sm:$0xff]
      %v844 = vld [vmem:[%s2 + $0x58] sm:$0xff]
      %v845 = vld [vmem:[%s2 + $0x60] sm:$0xff]
      %v846 = vld [vmem:[%s2 + $0x68] sm:$0xff]
      %v847 = vld [vmem:[%s2 + $0x70] sm:$0xff]
      %v848 = vld [vmem:[%s2 + $0x78] sm:$0xff]
      %v849 = vld [vmem:[%s2 + $0x80] sm:$0xff]
      %v850 = vld [vmem:[%s2 + $0x88] sm:$0xff]
      %v851 = vld [vmem:[%s2 + $0x90] sm:$0xff]
      %v852 = vld [vmem:[%s2 + $0x98] sm:$0xff]
      %v853 = vld [vmem:[%s2 + $0xa0] sm:$0xff]
      %v854 = vld [vmem:[%s2 + $0xa8] sm:$0xff]
      %v855 = vld [vmem:[%s2 + $0xb0] sm:$0xff]
      %v856 = vld [vmem:[%s2 + $0xb8] sm:$0xff]
      %v857 = vld [vmem:[%s2 + $0xc0] sm:$0xff]
      %v858 = vld [vmem:[%s2 + $0xc8] sm:$0xff]
      %v859 = vld [vmem:[%s2 + $0xd0] sm:$0xff]
      %v860 = vld [vmem:[%s2 + $0xd8] sm:$0xff]
      %v861 = vld [vmem:[%s2 + $0xe0] sm:$0xff]
      %v862 = vld [vmem:[%s2 + $0xe8] sm:$0xff]
      %v863 = vld [vmem:[%s2 + $0xf0] sm:$0xff]
      %v864 = vld [vmem:[%s2 + $0xf8] sm:$0xff]
      %866 = vset.pattern.permute.xlu0 0
      %867 = vperm.xlu0 %866, %v833
      %v868 = vpop.permute.xlu0 %867
      %871 = vset.pattern.permute.xlu0 0
      %872 = vperm.xlu0 %871, %v834
      %v873 = vpop.permute.xlu0 %872
      %876 = vset.pattern.permute.xlu0 0
      %877 = vperm.xlu0 %876, %v835
      %v878 = vpop.permute.xlu0 %877
      %881 = vset.pattern.permute.xlu0 0
      %882 = vperm.xlu0 %881, %v836
      %v883 = vpop.permute.xlu0 %882
      %886 = vset.pattern.permute.xlu0 0
      %887 = vperm.xlu0 %886, %v837
      %v888 = vpop.permute.xlu0 %887
      %891 = vset.pattern.permute.xlu0 0
      %892 = vperm.xlu0 %891, %v838
      %v893 = vpop.permute.xlu0 %892
      %896 = vset.pattern.permute.xlu0 0
      %897 = vperm.xlu0 %896, %v839
      %v898 = vpop.permute.xlu0 %897
      %901 = vset.pattern.permute.xlu0 0
      %902 = vperm.xlu0 %901, %v840
      %v903 = vpop.permute.xlu0 %902
      %906 = vset.pattern.permute.xlu0 0
      %907 = vperm.xlu0 %906, %v841
      %v908 = vpop.permute.xlu0 %907
      %911 = vset.pattern.permute.xlu0 0
      %912 = vperm.xlu0 %911, %v842
      %v913 = vpop.permute.xlu0 %912
      %916 = vset.pattern.permute.xlu0 0
      %917 = vperm.xlu0 %916, %v843
      %v918 = vpop.permute.xlu0 %917
      %921 = vset.pattern.permute.xlu0 0
      %922 = vperm.xlu0 %921, %v844
      %v923 = vpop.permute.xlu0 %922
      %926 = vset.pattern.permute.xlu0 0
      %927 = vperm.xlu0 %926, %v845
      %v928 = vpop.permute.xlu0 %927
      %931 = vset.pattern.permute.xlu0 0
      %932 = vperm.xlu0 %931, %v846
      %v933 = vpop.permute.xlu0 %932
      %936 = vset.pattern.permute.xlu0 0
      %937 = vperm.xlu0 %936, %v847
      %v938 = vpop.permute.xlu0 %937
      %941 = vset.pattern.permute.xlu0 0
      %942 = vperm.xlu0 %941, %v848
      %v943 = vpop.permute.xlu0 %942
      %946 = vset.pattern.permute.xlu0 0
      %947 = vperm.xlu0 %946, %v849
      %v948 = vpop.permute.xlu0 %947
      %951 = vset.pattern.permute.xlu0 0
      %952 = vperm.xlu0 %951, %v850
      %v953 = vpop.permute.xlu0 %952
      %956 = vset.pattern.permute.xlu0 0
      %957 = vperm.xlu0 %956, %v851
      %v958 = vpop.permute.xlu0 %957
      %961 = vset.pattern.permute.xlu0 0
      %962 = vperm.xlu0 %961, %v852
      %v963 = vpop.permute.xlu0 %962
      %966 = vset.pattern.permute.xlu0 0
      %967 = vperm.xlu0 %966, %v853
      %v968 = vpop.permute.xlu0 %967
      %971 = vset.pattern.permute.xlu0 0
      %972 = vperm.xlu0 %971, %v854
      %v973 = vpop.permute.xlu0 %972
      %976 = vset.pattern.permute.xlu0 0
      %977 = vperm.xlu0 %976, %v855
      %v978 = vpop.permute.xlu0 %977
      %981 = vset.pattern.permute.xlu0 0
      %982 = vperm.xlu0 %981, %v856
      %v983 = vpop.permute.xlu0 %982
      %986 = vset.pattern.permute.xlu0 0
      %987 = vperm.xlu0 %986, %v857
      %v988 = vpop.permute.xlu0 %987
      %991 = vset.pattern.permute.xlu0 0
      %992 = vperm.xlu0 %991, %v858
      %v993 = vpop.permute.xlu0 %992
      %996 = vset.pattern.permute.xlu0 0
      %997 = vperm.xlu0 %996, %v859
      %v998 = vpop.permute.xlu0 %997
      %1001 = vset.pattern.permute.xlu0 0
      %1002 = vperm.xlu0 %1001, %v860
      %v1003 = vpop.permute.xlu0 %1002
      %1006 = vset.pattern.permute.xlu0 0
      %1007 = vperm.xlu0 %1006, %v861
      %v1008 = vpop.permute.xlu0 %1007
      %1011 = vset.pattern.permute.xlu0 0
      %1012 = vperm.xlu0 %1011, %v862
      %v1013 = vpop.permute.xlu0 %1012
      %1016 = vset.pattern.permute.xlu0 0
      %1017 = vperm.xlu0 %1016, %v863
      %v1018 = vpop.permute.xlu0 %1017
      %1021 = vset.pattern.permute.xlu0 0
      %1022 = vperm.xlu0 %1021, %v864
      %v1023 = vpop.permute.xlu0 %1022
      %v1025 = vmul.f32 %v482, %v868
      %v1026 = vmul.f32 %v484, %v868
      %v1027 = vmul.f32 %v675, %v868
      %v1028 = vmul.f32 %v677, %v868
      %v1029 = vmul.f32 %v486, %v873
      %v1030 = vmul.f32 %v488, %v873
      %v1031 = vmul.f32 %v679, %v873
      %v1032 = vmul.f32 %v681, %v873
      %v1033 = vmul.f32 %v492, %v878
      %v1034 = vmul.f32 %v494, %v878
      %v1035 = vmul.f32 %v685, %v878
      %v1036 = vmul.f32 %v687, %v878
      %v1037 = vmul.f32 %v496, %v883
      %v1038 = vmul.f32 %v498, %v883
      %v1039 = vmul.f32 %v689, %v883
      %v1040 = vmul.f32 %v691, %v883
      %v1041 = vmul.f32 %v502, %v888
      %v1042 = vmul.f32 %v504, %v888
      %v1043 = vmul.f32 %v695, %v888
      %v1044 = vmul.f32 %v697, %v888
      %v1045 = vmul.f32 %v506, %v893
      %v1046 = vmul.f32 %v508, %v893
      %v1047 = vmul.f32 %v699, %v893
      %v1048 = vmul.f32 %v701, %v893
      %v1049 = vmul.f32 %v512, %v898
      %v1050 = vmul.f32 %v514, %v898
      %v1051 = vmul.f32 %v705, %v898
      %v1052 = vmul.f32 %v707, %v898
      %v1053 = vmul.f32 %v516, %v903
      %v1054 = vmul.f32 %v518, %v903
      %v1055 = vmul.f32 %v709, %v903
      %v1056 = vmul.f32 %v711, %v903
      %v1057 = vmul.f32 %v522, %v908
      %v1058 = vmul.f32 %v524, %v908
      %v1059 = vmul.f32 %v715, %v908
      %v1060 = vmul.f32 %v717, %v908
      %v1061 = vmul.f32 %v526, %v913
      %v1062 = vmul.f32 %v528, %v913
      %v1063 = vmul.f32 %v719, %v913
      %v1064 = vmul.f32 %v721, %v913
      %v1065 = vmul.f32 %v532, %v918
      %v1066 = vmul.f32 %v534, %v918
      %v1067 = vmul.f32 %v725, %v918
      %v1068 = vmul.f32 %v727, %v918
      %v1069 = vmul.f32 %v536, %v923
      %v1070 = vmul.f32 %v538, %v923
      %v1071 = vmul.f32 %v729, %v923
      %v1072 = vmul.f32 %v731, %v923
      %v1073 = vmul.f32 %v542, %v928
      %v1074 = vmul.f32 %v544, %v928
      %v1075 = vmul.f32 %v735, %v928
      %v1076 = vmul.f32 %v737, %v928
      %v1077 = vmul.f32 %v546, %v933
      %v1078 = vmul.f32 %v548, %v933
      %v1079 = vmul.f32 %v739, %v933
      %v1080 = vmul.f32 %v741, %v933
      %v1081 = vmul.f32 %v552, %v938
      %v1082 = vmul.f32 %v554, %v938
      %v1083 = vmul.f32 %v745, %v938
      %v1084 = vmul.f32 %v747, %v938
      %v1085 = vmul.f32 %v556, %v943
      %v1086 = vmul.f32 %v558, %v943
      %v1087 = vmul.f32 %v749, %v943
      %v1088 = vmul.f32 %v751, %v943
      %v1089 = vmul.f32 %v562, %v948
      %v1090 = vmul.f32 %v564, %v948
      %v1091 = vmul.f32 %v755, %v948
      %v1092 = vmul.f32 %v757, %v948
      %v1093 = vmul.f32 %v566, %v953
      %v1094 = vmul.f32 %v568, %v953
      %v1095 = vmul.f32 %v759, %v953
      %v1096 = vmul.f32 %v761, %v953
      %v1097 = vmul.f32 %v572, %v958
      %v1098 = vmul.f32 %v574, %v958
      %v1099 = vmul.f32 %v765, %v958
      %v1100 = vmul.f32 %v767, %v958
      %v1101 = vmul.f32 %v576, %v963
      %v1102 = vmul.f32 %v578, %v963
      %v1103 = vmul.f32 %v769, %v963
      %v1104 = vmul.f32 %v771, %v963
      %v1105 = vmul.f32 %v582, %v968
      %v1106 = vmul.f32 %v584, %v968
      %v1107 = vmul.f32 %v775, %v968
      %v1108 = vmul.f32 %v777, %v968
      %v1109 = vmul.f32 %v586, %v973
      %v1110 = vmul.f32 %v588, %v973
      %v1111 = vmul.f32 %v779, %v973
      %v1112 = vmul.f32 %v781, %v973
      %v1113 = vmul.f32 %v592, %v978
      %v1114 = vmul.f32 %v594, %v978
      %v1115 = vmul.f32 %v785, %v978
      %v1116 = vmul.f32 %v787, %v978
      %v1117 = vmul.f32 %v596, %v983
      %v1118 = vmul.f32 %v598, %v983
      %v1119 = vmul.f32 %v789, %v983
      %v1120 = vmul.f32 %v791, %v983
      %v1121 = vmul.f32 %v602, %v988
      %v1122 = vmul.f32 %v604, %v988
      %v1123 = vmul.f32 %v795, %v988
      %v1124 = vmul.f32 %v797, %v988
      %v1125 = vmul.f32 %v606, %v993
      %v1126 = vmul.f32 %v608, %v993
      %v1127 = vmul.f32 %v799, %v993
      %v1128 = vmul.f32 %v801, %v993
      %v1129 = vmul.f32 %v612, %v998
      %v1130 = vmul.f32 %v614, %v998
      %v1131 = vmul.f32 %v805, %v998
      %v1132 = vmul.f32 %v807, %v998
      %v1133 = vmul.f32 %v616, %v1003
      %v1134 = vmul.f32 %v618, %v1003
      %v1135 = vmul.f32 %v809, %v1003
      %v1136 = vmul.f32 %v811, %v1003
      %v1137 = vmul.f32 %v622, %v1008
      %v1138 = vmul.f32 %v624, %v1008
      %v1139 = vmul.f32 %v815, %v1008
      %v1140 = vmul.f32 %v817, %v1008
      %v1141 = vmul.f32 %v626, %v1013
      %v1142 = vmul.f32 %v628, %v1013
      %v1143 = vmul.f32 %v819, %v1013
      %v1144 = vmul.f32 %v821, %v1013
      %v1145 = vmul.f32 %v632, %v1018
      %v1146 = vmul.f32 %v634, %v1018
      %v1147 = vmul.f32 %v825, %v1018
      %v1148 = vmul.f32 %v827, %v1018
      %v1149 = vmul.f32 %v636, %v1023
      %v1150 = vmul.f32 %v638, %v1023
      %v1151 = vmul.f32 %v829, %v1023
      %v1152 = vmul.f32 %v831, %v1023
      %v1153 = vld [vmem:[%s3] sm:$0xff]
      %v1154 = vld [vmem:[%s3 + $0x8] sm:$0xff]
      %v1155 = vld [vmem:[%s3 + $0x10] sm:$0xff]
      %v1156 = vld [vmem:[%s3 + $0x18] sm:$0xff]
      %v1157 = vld [vmem:[%s3 + $0x20] sm:$0xff]
      %v1158 = vld [vmem:[%s3 + $0x28] sm:$0xff]
      %v1159 = vld [vmem:[%s3 + $0x30] sm:$0xff]
      %v1160 = vld [vmem:[%s3 + $0x38] sm:$0xff]
      %v1161 = vld [vmem:[%s3 + $0x40] sm:$0xff]
      %v1162 = vld [vmem:[%s3 + $0x48] sm:$0xff]
      %v1163 = vld [vmem:[%s3 + $0x50] sm:$0xff]
      %v1164 = vld [vmem:[%s3 + $0x58] sm:$0xff]
      %v1165 = vld [vmem:[%s3 + $0x60] sm:$0xff]
      %v1166 = vld [vmem:[%s3 + $0x68] sm:$0xff]
      %v1167 = vld [vmem:[%s3 + $0x70] sm:$0xff]
      %v1168 = vld [vmem:[%s3 + $0x78] sm:$0xff]
      %v1169 = vld [vmem:[%s3 + $0x80] sm:$0xff]
      %v1170 = vld [vmem:[%s3 + $0x88] sm:$0xff]
      %v1171 = vld [vmem:[%s3 + $0x90] sm:$0xff]
      %v1172 = vld [vmem:[%s3 + $0x98] sm:$0xff]
      %v1173 = vld [vmem:[%s3 + $0xa0] sm:$0xff]
      %v1174 = vld [vmem:[%s3 + $0xa8] sm:$0xff]
      %v1175 = vld [vmem:[%s3 + $0xb0] sm:$0xff]
      %v1176 = vld [vmem:[%s3 + $0xb8] sm:$0xff]
      %v1177 = vld [vmem:[%s3 + $0xc0] sm:$0xff]
      %v1178 = vld [vmem:[%s3 + $0xc8] sm:$0xff]
      %v1179 = vld [vmem:[%s3 + $0xd0] sm:$0xff]
      %v1180 = vld [vmem:[%s3 + $0xd8] sm:$0xff]
      %v1181 = vld [vmem:[%s3 + $0xe0] sm:$0xff]
      %v1182 = vld [vmem:[%s3 + $0xe8] sm:$0xff]
      %v1183 = vld [vmem:[%s3 + $0xf0] sm:$0xff]
      %v1184 = vld [vmem:[%s3 + $0xf8] sm:$0xff]
      %1186 = vset.pattern.permute.xlu0 0
      %1187 = vperm.xlu0 %1186, %v1153
      %v1188 = vpop.permute.xlu0 %1187
      %1191 = vset.pattern.permute.xlu0 0
      %1192 = vperm.xlu0 %1191, %v1154
      %v1193 = vpop.permute.xlu0 %1192
      %1196 = vset.pattern.permute.xlu0 0
      %1197 = vperm.xlu0 %1196, %v1155
      %v1198 = vpop.permute.xlu0 %1197
      %1201 = vset.pattern.permute.xlu0 0
      %1202 = vperm.xlu0 %1201, %v1156
      %v1203 = vpop.permute.xlu0 %1202
      %1206 = vset.pattern.permute.xlu0 0
      %1207 = vperm.xlu0 %1206, %v1157
      %v1208 = vpop.permute.xlu0 %1207
      %1211 = vset.pattern.permute.xlu0 0
      %1212 = vperm.xlu0 %1211, %v1158
      %v1213 = vpop.permute.xlu0 %1212
      %1216 = vset.pattern.permute.xlu0 0
      %1217 = vperm.xlu0 %1216, %v1159
      %v1218 = vpop.permute.xlu0 %1217
      %1221 = vset.pattern.permute.xlu0 0
      %1222 = vperm.xlu0 %1221, %v1160
      %v1223 = vpop.permute.xlu0 %1222
      %1226 = vset.pattern.permute.xlu0 0
      %1227 = vperm.xlu0 %1226, %v1161
      %v1228 = vpop.permute.xlu0 %1227
      %1231 = vset.pattern.permute.xlu0 0
      %1232 = vperm.xlu0 %1231, %v1162
      %v1233 = vpop.permute.xlu0 %1232
      %1236 = vset.pattern.permute.xlu0 0
      %1237 = vperm.xlu0 %1236, %v1163
      %v1238 = vpop.permute.xlu0 %1237
      %1241 = vset.pattern.permute.xlu0 0
      %1242 = vperm.xlu0 %1241, %v1164
      %v1243 = vpop.permute.xlu0 %1242
      %1246 = vset.pattern.permute.xlu0 0
      %1247 = vperm.xlu0 %1246, %v1165
      %v1248 = vpop.permute.xlu0 %1247
      %1251 = vset.pattern.permute.xlu0 0
      %1252 = vperm.xlu0 %1251, %v1166
      %v1253 = vpop.permute.xlu0 %1252
      %1256 = vset.pattern.permute.xlu0 0
      %1257 = vperm.xlu0 %1256, %v1167
      %v1258 = vpop.permute.xlu0 %1257
      %1261 = vset.pattern.permute.xlu0 0
      %1262 = vperm.xlu0 %1261, %v1168
      %v1263 = vpop.permute.xlu0 %1262
      %1266 = vset.pattern.permute.xlu0 0
      %1267 = vperm.xlu0 %1266, %v1169
      %v1268 = vpop.permute.xlu0 %1267
      %1271 = vset.pattern.permute.xlu0 0
      %1272 = vperm.xlu0 %1271, %v1170
      %v1273 = vpop.permute.xlu0 %1272
      %1276 = vset.pattern.permute.xlu0 0
      %1277 = vperm.xlu0 %1276, %v1171
      %v1278 = vpop.permute.xlu0 %1277
      %1281 = vset.pattern.permute.xlu0 0
      %1282 = vperm.xlu0 %1281, %v1172
      %v1283 = vpop.permute.xlu0 %1282
      %1286 = vset.pattern.permute.xlu0 0
      %1287 = vperm.xlu0 %1286, %v1173
      %v1288 = vpop.permute.xlu0 %1287
      %1291 = vset.pattern.permute.xlu0 0
      %1292 = vperm.xlu0 %1291, %v1174
      %v1293 = vpop.permute.xlu0 %1292
      %1296 = vset.pattern.permute.xlu0 0
      %1297 = vperm.xlu0 %1296, %v1175
      %v1298 = vpop.permute.xlu0 %1297
      %1301 = vset.pattern.permute.xlu0 0
      %1302 = vperm.xlu0 %1301, %v1176
      %v1303 = vpop.permute.xlu0 %1302
      %1306 = vset.pattern.permute.xlu0 0
      %1307 = vperm.xlu0 %1306, %v1177
      %v1308 = vpop.permute.xlu0 %1307
      %1311 = vset.pattern.permute.xlu0 0
      %1312 = vperm.xlu0 %1311, %v1178
      %v1313 = vpop.permute.xlu0 %1312
      %1316 = vset.pattern.permute.xlu0 0
      %1317 = vperm.xlu0 %1316, %v1179
      %v1318 = vpop.permute.xlu0 %1317
      %1321 = vset.pattern.permute.xlu0 0
      %1322 = vperm.xlu0 %1321, %v1180
      %v1323 = vpop.permute.xlu0 %1322
      %1326 = vset.pattern.permute.xlu0 0
      %1327 = vperm.xlu0 %1326, %v1181
      %v1328 = vpop.permute.xlu0 %1327
      %1331 = vset.pattern.permute.xlu0 0
      %1332 = vperm.xlu0 %1331, %v1182
      %v1333 = vpop.permute.xlu0 %1332
      %1336 = vset.pattern.permute.xlu0 0
      %1337 = vperm.xlu0 %1336, %v1183
      %v1338 = vpop.permute.xlu0 %1337
      %1341 = vset.pattern.permute.xlu0 0
      %1342 = vperm.xlu0 %1341, %v1184
      %v1343 = vpop.permute.xlu0 %1342
      %v1345 = vadd.f32 %v1025, %v1188
      %v1346 = vadd.f32 %v1026, %v1188
      %v1347 = vadd.f32 %v1027, %v1188
      %v1348 = vadd.f32 %v1028, %v1188
      %v1349 = vadd.f32 %v1029, %v1193
      %v1350 = vadd.f32 %v1030, %v1193
      %v1351 = vadd.f32 %v1031, %v1193
      %v1352 = vadd.f32 %v1032, %v1193
      %v1353 = vadd.f32 %v1033, %v1198
      %v1354 = vadd.f32 %v1034, %v1198
      %v1355 = vadd.f32 %v1035, %v1198
      %v1356 = vadd.f32 %v1036, %v1198
      %v1357 = vadd.f32 %v1037, %v1203
      %v1358 = vadd.f32 %v1038, %v1203
      %v1359 = vadd.f32 %v1039, %v1203
      %v1360 = vadd.f32 %v1040, %v1203
      %v1361 = vadd.f32 %v1041, %v1208
      %v1362 = vadd.f32 %v1042, %v1208
      %v1363 = vadd.f32 %v1043, %v1208
      %v1364 = vadd.f32 %v1044, %v1208
      %v1365 = vadd.f32 %v1045, %v1213
      %v1366 = vadd.f32 %v1046, %v1213
      %v1367 = vadd.f32 %v1047, %v1213
      %v1368 = vadd.f32 %v1048, %v1213
      %v1369 = vadd.f32 %v1049, %v1218
      %v1370 = vadd.f32 %v1050, %v1218
      %v1371 = vadd.f32 %v1051, %v1218
      %v1372 = vadd.f32 %v1052, %v1218
      %v1373 = vadd.f32 %v1053, %v1223
      %v1374 = vadd.f32 %v1054, %v1223
      %v1375 = vadd.f32 %v1055, %v1223
      %v1376 = vadd.f32 %v1056, %v1223
      %v1377 = vadd.f32 %v1057, %v1228
      %v1378 = vadd.f32 %v1058, %v1228
      %v1379 = vadd.f32 %v1059, %v1228
      %v1380 = vadd.f32 %v1060, %v1228
      %v1381 = vadd.f32 %v1061, %v1233
      %v1382 = vadd.f32 %v1062, %v1233
      %v1383 = vadd.f32 %v1063, %v1233
      %v1384 = vadd.f32 %v1064, %v1233
      %v1385 = vadd.f32 %v1065, %v1238
      %v1386 = vadd.f32 %v1066, %v1238
      %v1387 = vadd.f32 %v1067, %v1238
      %v1388 = vadd.f32 %v1068, %v1238
      %v1389 = vadd.f32 %v1069, %v1243
      %v1390 = vadd.f32 %v1070, %v1243
      %v1391 = vadd.f32 %v1071, %v1243
      %v1392 = vadd.f32 %v1072, %v1243
      %v1393 = vadd.f32 %v1073, %v1248
      %v1394 = vadd.f32 %v1074, %v1248
      %v1395 = vadd.f32 %v1075, %v1248
      %v1396 = vadd.f32 %v1076, %v1248
      %v1397 = vadd.f32 %v1077, %v1253
      %v1398 = vadd.f32 %v1078, %v1253
      %v1399 = vadd.f32 %v1079, %v1253
      %v1400 = vadd.f32 %v1080, %v1253
      %v1401 = vadd.f32 %v1081, %v1258
      %v1402 = vadd.f32 %v1082, %v1258
      %v1403 = vadd.f32 %v1083, %v1258
      %v1404 = vadd.f32 %v1084, %v1258
      %v1405 = vadd.f32 %v1085, %v1263
      %v1406 = vadd.f32 %v1086, %v1263
      %v1407 = vadd.f32 %v1087, %v1263
      %v1408 = vadd.f32 %v1088, %v1263
      %v1409 = vadd.f32 %v1089, %v1268
      %v1410 = vadd.f32 %v1090, %v1268
      %v1411 = vadd.f32 %v1091, %v1268
      %v1412 = vadd.f32 %v1092, %v1268
      %v1413 = vadd.f32 %v1093, %v1273
      %v1414 = vadd.f32 %v1094, %v1273
      %v1415 = vadd.f32 %v1095, %v1273
      %v1416 = vadd.f32 %v1096, %v1273
      %v1417 = vadd.f32 %v1097, %v1278
      %v1418 = vadd.f32 %v1098, %v1278
      %v1419 = vadd.f32 %v1099, %v1278
      %v1420 = vadd.f32 %v1100, %v1278
      %v1421 = vadd.f32 %v1101, %v1283
      %v1422 = vadd.f32 %v1102, %v1283
      %v1423 = vadd.f32 %v1103, %v1283
      %v1424 = vadd.f32 %v1104, %v1283
      %v1425 = vadd.f32 %v1105, %v1288
      %v1426 = vadd.f32 %v1106, %v1288
      %v1427 = vadd.f32 %v1107, %v1288
      %v1428 = vadd.f32 %v1108, %v1288
      %v1429 = vadd.f32 %v1109, %v1293
      %v1430 = vadd.f32 %v1110, %v1293
      %v1431 = vadd.f32 %v1111, %v1293
      %v1432 = vadd.f32 %v1112, %v1293
      %v1433 = vadd.f32 %v1113, %v1298
      %v1434 = vadd.f32 %v1114, %v1298
      %v1435 = vadd.f32 %v1115, %v1298
      %v1436 = vadd.f32 %v1116, %v1298
      %v1437 = vadd.f32 %v1117, %v1303
      %v1438 = vadd.f32 %v1118, %v1303
      %v1439 = vadd.f32 %v1119, %v1303
      %v1440 = vadd.f32 %v1120, %v1303
      %v1441 = vadd.f32 %v1121, %v1308
      %v1442 = vadd.f32 %v1122, %v1308
      %v1443 = vadd.f32 %v1123, %v1308
      %v1444 = vadd.f32 %v1124, %v1308
      %v1445 = vadd.f32 %v1125, %v1313
      %v1446 = vadd.f32 %v1126, %v1313
      %v1447 = vadd.f32 %v1127, %v1313
      %v1448 = vadd.f32 %v1128, %v1313
      %v1449 = vadd.f32 %v1129, %v1318
      %v1450 = vadd.f32 %v1130, %v1318
      %v1451 = vadd.f32 %v1131, %v1318
      %v1452 = vadd.f32 %v1132, %v1318
      %v1453 = vadd.f32 %v1133, %v1323
      %v1454 = vadd.f32 %v1134, %v1323
      %v1455 = vadd.f32 %v1135, %v1323
      %v1456 = vadd.f32 %v1136, %v1323
      %v1457 = vadd.f32 %v1137, %v1328
      %v1458 = vadd.f32 %v1138, %v1328
      %v1459 = vadd.f32 %v1139, %v1328
      %v1460 = vadd.f32 %v1140, %v1328
      %v1461 = vadd.f32 %v1141, %v1333
      %v1462 = vadd.f32 %v1142, %v1333
      %v1463 = vadd.f32 %v1143, %v1333
      %v1464 = vadd.f32 %v1144, %v1333
      %v1465 = vadd.f32 %v1145, %v1338
      %v1466 = vadd.f32 %v1146, %v1338
      %v1467 = vadd.f32 %v1147, %v1338
      %v1468 = vadd.f32 %v1148, %v1338
      %v1469 = vadd.f32 %v1149, %v1343
      %v1470 = vadd.f32 %v1150, %v1343
      %v1471 = vadd.f32 %v1151, %v1343
      %v1472 = vadd.f32 %v1152, %v1343
      %v1473 = vmax.f32 %v1345, 0.0
      %v1474 = vmax.f32 %v1346, 0.0
      %v1475 = vmax.f32 %v1347, 0.0
      %v1476 = vmax.f32 %v1348, 0.0
      %v1477 = vmax.f32 %v1349, 0.0
      %v1478 = vmax.f32 %v1350, 0.0
      %v1479 = vmax.f32 %v1351, 0.0
      %v1480 = vmax.f32 %v1352, 0.0
      %v1481 = vmax.f32 %v1353, 0.0
      %v1482 = vmax.f32 %v1354, 0.0
      %v1483 = vmax.f32 %v1355, 0.0
      %v1484 = vmax.f32 %v1356, 0.0
      %v1485 = vmax.f32 %v1357, 0.0
      %v1486 = vmax.f32 %v1358, 0.0
      %v1487 = vmax.f32 %v1359, 0.0
      %v1488 = vmax.f32 %v1360, 0.0
      %v1489 = vmax.f32 %v1361, 0.0
      %v1490 = vmax.f32 %v1362, 0.0
      %v1491 = vmax.f32 %v1363, 0.0
      %v1492 = vmax.f32 %v1364, 0.0
      %v1493 = vmax.f32 %v1365, 0.0
      %v1494 = vmax.f32 %v1366, 0.0
      %v1495 = vmax.f32 %v1367, 0.0
      %v1496 = vmax.f32 %v1368, 0.0
      %v1497 = vmax.f32 %v1369, 0.0
      %v1498 = vmax.f32 %v1370, 0.0
      %v1499 = vmax.f32 %v1371, 0.0
      %v1500 = vmax.f32 %v1372, 0.0
      %v1501 = vmax.f32 %v1373, 0.0
      %v1502 = vmax.f32 %v1374, 0.0
      %v1503 = vmax.f32 %v1375, 0.0
      %v1504 = vmax.f32 %v1376, 0.0
      %v1505 = vmax.f32 %v1377, 0.0
      %v1506 = vmax.f32 %v1378, 0.0
      %v1507 = vmax.f32 %v1379, 0.0
      %v1508 = vmax.f32 %v1380, 0.0
      %v1509 = vmax.f32 %v1381, 0.0
      %v1510 = vmax.f32 %v1382, 0.0
      %v1511 = vmax.f32 %v1383, 0.0
      %v1512 = vmax.f32 %v1384, 0.0
      %v1513 = vmax.f32 %v1385, 0.0
      %v1514 = vmax.f32 %v1386, 0.0
      %v1515 = vmax.f32 %v1387, 0.0
      %v1516 = vmax.f32 %v1388, 0.0
      %v1517 = vmax.f32 %v1389, 0.0
      %v1518 = vmax.f32 %v1390, 0.0
      %v1519 = vmax.f32 %v1391, 0.0
      %v1520 = vmax.f32 %v1392, 0.0
      %v1521 = vmax.f32 %v1393, 0.0
      %v1522 = vmax.f32 %v1394, 0.0
      %v1523 = vmax.f32 %v1395, 0.0
      %v1524 = vmax.f32 %v1396, 0.0
      %v1525 = vmax.f32 %v1397, 0.0
      %v1526 = vmax.f32 %v1398, 0.0
      %v1527 = vmax.f32 %v1399, 0.0
      %v1528 = vmax.f32 %v1400, 0.0
      %v1529 = vmax.f32 %v1401, 0.0
      %v1530 = vmax.f32 %v1402, 0.0
      %v1531 = vmax.f32 %v1403, 0.0
      %v1532 = vmax.f32 %v1404, 0.0
      %v1533 = vmax.f32 %v1405, 0.0
      %v1534 = vmax.f32 %v1406, 0.0
      %v1535 = vmax.f32 %v1407, 0.0
      %v1536 = vmax.f32 %v1408, 0.0
      %v1537 = vmax.f32 %v1409, 0.0
      %v1538 = vmax.f32 %v1410, 0.0
      %v1539 = vmax.f32 %v1411, 0.0
      %v1540 = vmax.f32 %v1412, 0.0
      %v1541 = vmax.f32 %v1413, 0.0
      %v1542 = vmax.f32 %v1414, 0.0
      %v1543 = vmax.f32 %v1415, 0.0
      %v1544 = vmax.f32 %v1416, 0.0
      %v1545 = vmax.f32 %v1417, 0.0
      %v1546 = vmax.f32 %v1418, 0.0
      %v1547 = vmax.f32 %v1419, 0.0
      %v1548 = vmax.f32 %v1420, 0.0
      %v1549 = vmax.f32 %v1421, 0.0
      %v1550 = vmax.f32 %v1422, 0.0
      %v1551 = vmax.f32 %v1423, 0.0
      %v1552 = vmax.f32 %v1424, 0.0
      %v1553 = vmax.f32 %v1425, 0.0
      %v1554 = vmax.f32 %v1426, 0.0
      %v1555 = vmax.f32 %v1427, 0.0
      %v1556 = vmax.f32 %v1428, 0.0
      %v1557 = vmax.f32 %v1429, 0.0
      %v1558 = vmax.f32 %v1430, 0.0
      %v1559 = vmax.f32 %v1431, 0.0
      %v1560 = vmax.f32 %v1432, 0.0
      %v1561 = vmax.f32 %v1433, 0.0
      %v1562 = vmax.f32 %v1434, 0.0
      %v1563 = vmax.f32 %v1435, 0.0
      %v1564 = vmax.f32 %v1436, 0.0
      %v1565 = vmax.f32 %v1437, 0.0
      %v1566 = vmax.f32 %v1438, 0.0
      %v1567 = vmax.f32 %v1439, 0.0
      %v1568 = vmax.f32 %v1440, 0.0
      %v1569 = vmax.f32 %v1441, 0.0
      %v1570 = vmax.f32 %v1442, 0.0
      %v1571 = vmax.f32 %v1443, 0.0
      %v1572 = vmax.f32 %v1444, 0.0
      %v1573 = vmax.f32 %v1445, 0.0
      %v1574 = vmax.f32 %v1446, 0.0
      %v1575 = vmax.f32 %v1447, 0.0
      %v1576 = vmax.f32 %v1448, 0.0
      %v1577 = vmax.f32 %v1449, 0.0
      %v1578 = vmax.f32 %v1450, 0.0
      %v1579 = vmax.f32 %v1451, 0.0
      %v1580 = vmax.f32 %v1452, 0.0
      %v1581 = vmax.f32 %v1453, 0.0
      %v1582 = vmax.f32 %v1454, 0.0
      %v1583 = vmax.f32 %v1455, 0.0
      %v1584 = vmax.f32 %v1456, 0.0
      %v1585 = vmax.f32 %v1457, 0.0
      %v1586 = vmax.f32 %v1458, 0.0
      %v1587 = vmax.f32 %v1459, 0.0
      %v1588 = vmax.f32 %v1460, 0.0
      %v1589 = vmax.f32 %v1461, 0.0
      %v1590 = vmax.f32 %v1462, 0.0
      %v1591 = vmax.f32 %v1463, 0.0
      %v1592 = vmax.f32 %v1464, 0.0
      %v1593 = vmax.f32 %v1465, 0.0
      %v1594 = vmax.f32 %v1466, 0.0
      %v1595 = vmax.f32 %v1467, 0.0
      %v1596 = vmax.f32 %v1468, 0.0
      %v1597 = vmax.f32 %v1469, 0.0
      %v1598 = vmax.f32 %v1470, 0.0
      %v1599 = vmax.f32 %v1471, 0.0
      %v1600 = vmax.f32 %v1472, 0.0
      %v1601 = vpack.c.bf16 %v1477, %v1473
      %v1602 = vpack.c.bf16 %v1478, %v1474
      %v1603 = vpack.c.bf16 %v1479, %v1475
      %v1604 = vpack.c.bf16 %v1480, %v1476
      %v1605 = vpack.c.bf16 %v1485, %v1481
      %v1606 = vpack.c.bf16 %v1486, %v1482
      %v1607 = vpack.c.bf16 %v1487, %v1483
      %v1608 = vpack.c.bf16 %v1488, %v1484
      %v1609 = vpack.c.bf16 %v1493, %v1489
      %v1610 = vpack.c.bf16 %v1494, %v1490
      %v1611 = vpack.c.bf16 %v1495, %v1491
      %v1612 = vpack.c.bf16 %v1496, %v1492
      %v1613 = vpack.c.bf16 %v1501, %v1497
      %v1614 = vpack.c.bf16 %v1502, %v1498
      %v1615 = vpack.c.bf16 %v1503, %v1499
      %v1616 = vpack.c.bf16 %v1504, %v1500
      %v1617 = vpack.c.bf16 %v1509, %v1505
      %v1618 = vpack.c.bf16 %v1510, %v1506
      %v1619 = vpack.c.bf16 %v1511, %v1507
      %v1620 = vpack.c.bf16 %v1512, %v1508
      %v1621 = vpack.c.bf16 %v1517, %v1513
      %v1622 = vpack.c.bf16 %v1518, %v1514
      %v1623 = vpack.c.bf16 %v1519, %v1515
      %v1624 = vpack.c.bf16 %v1520, %v1516
      %v1625 = vpack.c.bf16 %v1525, %v1521
      %v1626 = vpack.c.bf16 %v1526, %v1522
      %v1627 = vpack.c.bf16 %v1527, %v1523
      %v1628 = vpack.c.bf16 %v1528, %v1524
      %v1629 = vpack.c.bf16 %v1533, %v1529
      %v1630 = vpack.c.bf16 %v1534, %v1530
      %v1631 = vpack.c.bf16 %v1535, %v1531
      %v1632 = vpack.c.bf16 %v1536, %v1532
      %v1633 = vpack.c.bf16 %v1541, %v1537
      %v1634 = vpack.c.bf16 %v1542, %v1538
      %v1635 = vpack.c.bf16 %v1543, %v1539
      %v1636 = vpack.c.bf16 %v1544, %v1540
      %v1637 = vpack.c.bf16 %v1549, %v1545
      %v1638 = vpack.c.bf16 %v1550, %v1546
      %v1639 = vpack.c.bf16 %v1551, %v1547
      %v1640 = vpack.c.bf16 %v1552, %v1548
      %v1641 = vpack.c.bf16 %v1557, %v1553
      %v1642 = vpack.c.bf16 %v1558, %v1554
      %v1643 = vpack.c.bf16 %v1559, %v1555
      %v1644 = vpack.c.bf16 %v1560, %v1556
      %v1645 = vpack.c.bf16 %v1565, %v1561
      %v1646 = vpack.c.bf16 %v1566, %v1562
      %v1647 = vpack.c.bf16 %v1567, %v1563
      %v1648 = vpack.c.bf16 %v1568, %v1564
      %v1649 = vpack.c.bf16 %v1573, %v1569
      %v1650 = vpack.c.bf16 %v1574, %v1570
      %v1651 = vpack.c.bf16 %v1575, %v1571
      %v1652 = vpack.c.bf16 %v1576, %v1572
      %v1653 = vpack.c.bf16 %v1581, %v1577
      %v1654 = vpack.c.bf16 %v1582, %v1578
      %v1655 = vpack.c.bf16 %v1583, %v1579
      %v1656 = vpack.c.bf16 %v1584, %v1580
      %v1657 = vpack.c.bf16 %v1589, %v1585
      %v1658 = vpack.c.bf16 %v1590, %v1586
      %v1659 = vpack.c.bf16 %v1591, %v1587
      %v1660 = vpack.c.bf16 %v1592, %v1588
      %v1661 = vpack.c.bf16 %v1597, %v1593
      %v1662 = vpack.c.bf16 %v1598, %v1594
      %v1663 = vpack.c.bf16 %v1599, %v1595
      %v1664 = vpack.c.bf16 %v1600, %v1596
      %v1729 = vunpack.c.l.b16 %v1601
      %v1730 = vunpack.c.l.b16 %v1602
      %v1731 = vunpack.c.l.b16 %v1603
      %v1732 = vunpack.c.l.b16 %v1604
      %v1733 = vunpack.c.h.b16 %v1601
      %v1734 = vunpack.c.h.b16 %v1602
      %v1735 = vunpack.c.h.b16 %v1603
      %v1736 = vunpack.c.h.b16 %v1604
      %v1737 = vunpack.c.l.b16 %v1605
      %v1738 = vunpack.c.l.b16 %v1606
      %v1739 = vunpack.c.l.b16 %v1607
      %v1740 = vunpack.c.l.b16 %v1608
      %v1741 = vunpack.c.h.b16 %v1605
      %v1742 = vunpack.c.h.b16 %v1606
      %v1743 = vunpack.c.h.b16 %v1607
      %v1744 = vunpack.c.h.b16 %v1608
      %v1745 = vunpack.c.l.b16 %v1609
      %v1746 = vunpack.c.l.b16 %v1610
      %v1747 = vunpack.c.l.b16 %v1611
      %v1748 = vunpack.c.l.b16 %v1612
      %v1749 = vunpack.c.h.b16 %v1609
      %v1750 = vunpack.c.h.b16 %v1610
      %v1751 = vunpack.c.h.b16 %v1611
      %v1752 = vunpack.c.h.b16 %v1612
      %v1753 = vunpack.c.l.b16 %v1613
      %v1754 = vunpack.c.l.b16 %v1614
      %v1755 = vunpack.c.l.b16 %v1615
      %v1756 = vunpack.c.l.b16 %v1616
      %v1757 = vunpack.c.h.b16 %v1613
      %v1758 = vunpack.c.h.b16 %v1614
      %v1759 = vunpack.c.h.b16 %v1615
      %v1760 = vunpack.c.h.b16 %v1616
      %v1761 = vunpack.c.l.b16 %v1617
      %v1762 = vunpack.c.l.b16 %v1618
      %v1763 = vunpack.c.l.b16 %v1619
      %v1764 = vunpack.c.l.b16 %v1620
      %v1765 = vunpack.c.h.b16 %v1617
      %v1766 = vunpack.c.h.b16 %v1618
      %v1767 = vunpack.c.h.b16 %v1619
      %v1768 = vunpack.c.h.b16 %v1620
      %v1769 = vunpack.c.l.b16 %v1621
      %v1770 = vunpack.c.l.b16 %v1622
      %v1771 = vunpack.c.l.b16 %v1623
      %v1772 = vunpack.c.l.b16 %v1624
      %v1773 = vunpack.c.h.b16 %v1621
      %v1774 = vunpack.c.h.b16 %v1622
      %v1775 = vunpack.c.h.b16 %v1623
      %v1776 = vunpack.c.h.b16 %v1624
      %v1777 = vunpack.c.l.b16 %v1625
      %v1778 = vunpack.c.l.b16 %v1626
      %v1779 = vunpack.c.l.b16 %v1627
      %v1780 = vunpack.c.l.b16 %v1628
      %v1781 = vunpack.c.h.b16 %v1625
      %v1782 = vunpack.c.h.b16 %v1626
      %v1783 = vunpack.c.h.b16 %v1627
      %v1784 = vunpack.c.h.b16 %v1628
      %v1785 = vunpack.c.l.b16 %v1629
      %v1786 = vunpack.c.l.b16 %v1630
      %v1787 = vunpack.c.l.b16 %v1631
      %v1788 = vunpack.c.l.b16 %v1632
      %v1789 = vunpack.c.h.b16 %v1629
      %v1790 = vunpack.c.h.b16 %v1630
      %v1791 = vunpack.c.h.b16 %v1631
      %v1792 = vunpack.c.h.b16 %v1632
      %v1793 = vunpack.c.l.b16 %v1633
      %v1794 = vunpack.c.l.b16 %v1634
      %v1795 = vunpack.c.l.b16 %v1635
      %v1796 = vunpack.c.l.b16 %v1636
      %v1797 = vunpack.c.h.b16 %v1633
      %v1798 = vunpack.c.h.b16 %v1634
      %v1799 = vunpack.c.h.b16 %v1635
      %v1800 = vunpack.c.h.b16 %v1636
      %v1801 = vunpack.c.l.b16 %v1637
      %v1802 = vunpack.c.l.b16 %v1638
      %v1803 = vunpack.c.l.b16 %v1639
      %v1804 = vunpack.c.l.b16 %v1640
      %v1805 = vunpack.c.h.b16 %v1637
      %v1806 = vunpack.c.h.b16 %v1638
      %v1807 = vunpack.c.h.b16 %v1639
      %v1808 = vunpack.c.h.b16 %v1640
      %v1809 = vunpack.c.l.b16 %v1641
      %v1810 = vunpack.c.l.b16 %v1642
      %v1811 = vunpack.c.l.b16 %v1643
      %v1812 = vunpack.c.l.b16 %v1644
      %v1813 = vunpack.c.h.b16 %v1641
      %v1814 = vunpack.c.h.b16 %v1642
      %v1815 = vunpack.c.h.b16 %v1643
      %v1816 = vunpack.c.h.b16 %v1644
      %v1817 = vunpack.c.l.b16 %v1645
      %v1818 = vunpack.c.l.b16 %v1646
      %v1819 = vunpack.c.l.b16 %v1647
      %v1820 = vunpack.c.l.b16 %v1648
      %v1821 = vunpack.c.h.b16 %v1645
      %v1822 = vunpack.c.h.b16 %v1646
      %v1823 = vunpack.c.h.b16 %v1647
      %v1824 = vunpack.c.h.b16 %v1648
      %v1825 = vunpack.c.l.b16 %v1649
      %v1826 = vunpack.c.l.b16 %v1650
      %v1827 = vunpack.c.l.b16 %v1651
      %v1828 = vunpack.c.l.b16 %v1652
      %v1829 = vunpack.c.h.b16 %v1649
      %v1830 = vunpack.c.h.b16 %v1650
      %v1831 = vunpack.c.h.b16 %v1651
      %v1832 = vunpack.c.h.b16 %v1652
      %v1833 = vunpack.c.l.b16 %v1653
      %v1834 = vunpack.c.l.b16 %v1654
      %v1835 = vunpack.c.l.b16 %v1655
      %v1836 = vunpack.c.l.b16 %v1656
      %v1837 = vunpack.c.h.b16 %v1653
      %v1838 = vunpack.c.h.b16 %v1654
      %v1839 = vunpack.c.h.b16 %v1655
      %v1840 = vunpack.c.h.b16 %v1656
      %v1841 = vunpack.c.l.b16 %v1657
      %v1842 = vunpack.c.l.b16 %v1658
      %v1843 = vunpack.c.l.b16 %v1659
      %v1844 = vunpack.c.l.b16 %v1660
      %v1845 = vunpack.c.h.b16 %v1657
      %v1846 = vunpack.c.h.b16 %v1658
      %v1847 = vunpack.c.h.b16 %v1659
      %v1848 = vunpack.c.h.b16 %v1660
      %v1849 = vunpack.c.l.b16 %v1661
      %v1850 = vunpack.c.l.b16 %v1662
      %v1851 = vunpack.c.l.b16 %v1663
      %v1852 = vunpack.c.l.b16 %v1664
      %v1853 = vunpack.c.h.b16 %v1661
      %v1854 = vunpack.c.h.b16 %v1662
      %v1855 = vunpack.c.h.b16 %v1663
      %v1856 = vunpack.c.h.b16 %v1664
      %v1857 = vpack.c.b16 %v1730, %v1729
      %v1858 = vpack.c.b16 %v1732, %v1731
      %v1859 = vpack.c.b16 %v1734, %v1733
      %v1860 = vpack.c.b16 %v1736, %v1735
      %v1861 = vpack.c.b16 %v1738, %v1737
      %v1862 = vpack.c.b16 %v1740, %v1739
      %v1863 = vpack.c.b16 %v1742, %v1741
      %v1864 = vpack.c.b16 %v1744, %v1743
      %v1865 = vpack.c.b16 %v1746, %v1745
      %v1866 = vpack.c.b16 %v1748, %v1747
      %v1867 = vpack.c.b16 %v1750, %v1749
      %v1868 = vpack.c.b16 %v1752, %v1751
      %v1869 = vpack.c.b16 %v1754, %v1753
      %v1870 = vpack.c.b16 %v1756, %v1755
      %v1871 = vpack.c.b16 %v1758, %v1757
      %v1872 = vpack.c.b16 %v1760, %v1759
      %v1873 = vpack.c.b16 %v1762, %v1761
      %v1874 = vpack.c.b16 %v1764, %v1763
      %v1875 = vpack.c.b16 %v1766, %v1765
      %v1876 = vpack.c.b16 %v1768, %v1767
      %v1877 = vpack.c.b16 %v1770, %v1769
      %v1878 = vpack.c.b16 %v1772, %v1771
      %v1879 = vpack.c.b16 %v1774, %v1773
      %v1880 = vpack.c.b16 %v1776, %v1775
      %v1881 = vpack.c.b16 %v1778, %v1777
      %v1882 = vpack.c.b16 %v1780, %v1779
      %v1883 = vpack.c.b16 %v1782, %v1781
      %v1884 = vpack.c.b16 %v1784, %v1783
      %v1885 = vpack.c.b16 %v1786, %v1785
      %v1886 = vpack.c.b16 %v1788, %v1787
      %v1887 = vpack.c.b16 %v1790, %v1789
      %v1888 = vpack.c.b16 %v1792, %v1791
      %v1889 = vpack.c.b16 %v1794, %v1793
      %v1890 = vpack.c.b16 %v1796, %v1795
      %v1891 = vpack.c.b16 %v1798, %v1797
      %v1892 = vpack.c.b16 %v1800, %v1799
      %v1893 = vpack.c.b16 %v1802, %v1801
      %v1894 = vpack.c.b16 %v1804, %v1803
      %v1895 = vpack.c.b16 %v1806, %v1805
      %v1896 = vpack.c.b16 %v1808, %v1807
      %v1897 = vpack.c.b16 %v1810, %v1809
      %v1898 = vpack.c.b16 %v1812, %v1811
      %v1899 = vpack.c.b16 %v1814, %v1813
      %v1900 = vpack.c.b16 %v1816, %v1815
      %v1901 = vpack.c.b16 %v1818, %v1817
      %v1902 = vpack.c.b16 %v1820, %v1819
      %v1903 = vpack.c.b16 %v1822, %v1821
      %v1904 = vpack.c.b16 %v1824, %v1823
      %v1905 = vpack.c.b16 %v1826, %v1825
      %v1906 = vpack.c.b16 %v1828, %v1827
      %v1907 = vpack.c.b16 %v1830, %v1829
      %v1908 = vpack.c.b16 %v1832, %v1831
      %v1909 = vpack.c.b16 %v1834, %v1833
      %v1910 = vpack.c.b16 %v1836, %v1835
      %v1911 = vpack.c.b16 %v1838, %v1837
      %v1912 = vpack.c.b16 %v1840, %v1839
      %v1913 = vpack.c.b16 %v1842, %v1841
      %v1914 = vpack.c.b16 %v1844, %v1843
      %v1915 = vpack.c.b16 %v1846, %v1845
      %v1916 = vpack.c.b16 %v1848, %v1847
      %v1917 = vpack.c.b16 %v1850, %v1849
      %v1918 = vpack.c.b16 %v1852, %v1851
      %v1919 = vpack.c.b16 %v1854, %v1853
      %v1920 = vpack.c.b16 %v1856, %v1855
      %1985 = vst [vmem:[%s235] sm:$0xff] %v1857
      %1986 = vst [vmem:[%s235 + $0x8] sm:$0xff] %v1858
      %1987 = vst [vmem:[%s235 + $0x10] sm:$0xff] %v1859
      %1988 = vst [vmem:[%s235 + $0x18] sm:$0xff] %v1860
      %1989 = vst [vmem:[%s235 + $0x20] sm:$0xff] %v1861
      %1990 = vst [vmem:[%s235 + $0x28] sm:$0xff] %v1862
      %1991 = vst [vmem:[%s235 + $0x30] sm:$0xff] %v1863
      %1992 = vst [vmem:[%s235 + $0x38] sm:$0xff] %v1864
      %1993 = vst [vmem:[%s235 + $0x40] sm:$0xff] %v1865
      %1994 = vst [vmem:[%s235 + $0x48] sm:$0xff] %v1866
      %1995 = vst [vmem:[%s235 + $0x50] sm:$0xff] %v1867
      %1996 = vst [vmem:[%s235 + $0x58] sm:$0xff] %v1868
      %1997 = vst [vmem:[%s235 + $0x60] sm:$0xff] %v1869
      %1998 = vst [vmem:[%s235 + $0x68] sm:$0xff] %v1870
      %1999 = vst [vmem:[%s235 + $0x70] sm:$0xff] %v1871
      %2000 = vst [vmem:[%s235 + $0x78] sm:$0xff] %v1872
      %2001 = vst [vmem:[%s235 + $0x80] sm:$0xff] %v1873
      %2002 = vst [vmem:[%s235 + $0x88] sm:$0xff] %v1874
      %2003 = vst [vmem:[%s235 + $0x90] sm:$0xff] %v1875
      %2004 = vst [vmem:[%s235 + $0x98] sm:$0xff] %v1876
      %2005 = vst [vmem:[%s235 + $0xa0] sm:$0xff] %v1877
      %2006 = vst [vmem:[%s235 + $0xa8] sm:$0xff] %v1878
      %2007 = vst [vmem:[%s235 + $0xb0] sm:$0xff] %v1879
      %2008 = vst [vmem:[%s235 + $0xb8] sm:$0xff] %v1880
      %2009 = vst [vmem:[%s235 + $0xc0] sm:$0xff] %v1881
      %2010 = vst [vmem:[%s235 + $0xc8] sm:$0xff] %v1882
      %2011 = vst [vmem:[%s235 + $0xd0] sm:$0xff] %v1883
      %2012 = vst [vmem:[%s235 + $0xd8] sm:$0xff] %v1884
      %2013 = vst [vmem:[%s235 + $0xe0] sm:$0xff] %v1885
      %2014 = vst [vmem:[%s235 + $0xe8] sm:$0xff] %v1886
      %2015 = vst [vmem:[%s235 + $0xf0] sm:$0xff] %v1887
      %2016 = vst [vmem:[%s235 + $0xf8] sm:$0xff] %v1888
      %2017 = vst [vmem:[%s235 + $0x100] sm:$0xff] %v1889
      %2018 = vst [vmem:[%s235 + $0x108] sm:$0xff] %v1890
      %2019 = vst [vmem:[%s235 + $0x110] sm:$0xff] %v1891
      %2020 = vst [vmem:[%s235 + $0x118] sm:$0xff] %v1892
      %2021 = vst [vmem:[%s235 + $0x120] sm:$0xff] %v1893
      %2022 = vst [vmem:[%s235 + $0x128] sm:$0xff] %v1894
      %2023 = vst [vmem:[%s235 + $0x130] sm:$0xff] %v1895
      %2024 = vst [vmem:[%s235 + $0x138] sm:$0xff] %v1896
      %2025 = vst [vmem:[%s235 + $0x140] sm:$0xff] %v1897
      %2026 = vst [vmem:[%s235 + $0x148] sm:$0xff] %v1898
      %2027 = vst [vmem:[%s235 + $0x150] sm:$0xff] %v1899
      %2028 = vst [vmem:[%s235 + $0x158] sm:$0xff] %v1900
      %2029 = vst [vmem:[%s235 + $0x160] sm:$0xff] %v1901
      %2030 = vst [vmem:[%s235 + $0x168] sm:$0xff] %v1902
      %2031 = vst [vmem:[%s235 + $0x170] sm:$0xff] %v1903
      %2032 = vst [vmem:[%s235 + $0x178] sm:$0xff] %v1904
      %2033 = vst [vmem:[%s235 + $0x180] sm:$0xff] %v1905
      %2034 = vst [vmem:[%s235 + $0x188] sm:$0xff] %v1906
      %2035 = vst [vmem:[%s235 + $0x190] sm:$0xff] %v1907
      %2036 = vst [vmem:[%s235 + $0x198] sm:$0xff] %v1908
      %2037 = vst [vmem:[%s235 + $0x1a0] sm:$0xff] %v1909
      %2038 = vst [vmem:[%s235 + $0x1a8] sm:$0xff] %v1910
      %2039 = vst [vmem:[%s235 + $0x1b0] sm:$0xff] %v1911
      %2040 = vst [vmem:[%s235 + $0x1b8] sm:$0xff] %v1912
      %2041 = vst [vmem:[%s235 + $0x1c0] sm:$0xff] %v1913
      %2042 = vst [vmem:[%s235 + $0x1c8] sm:$0xff] %v1914
      %2043 = vst [vmem:[%s235 + $0x1d0] sm:$0xff] %v1915
      %2044 = vst [vmem:[%s235 + $0x1d8] sm:$0xff] %v1916
      %2045 = vst [vmem:[%s235 + $0x1e0] sm:$0xff] %v1917
      %2046 = vst [vmem:[%s235 + $0x1e8] sm:$0xff] %v1918
      %2047 = vst [vmem:[%s235 + $0x1f0] sm:$0xff] %v1919
      %2048 = vst [vmem:[%s235 + $0x1f8] sm:$0xff] %v1920
      %s2049 = smul.u32 4, %s20
      %p2050 = scmp.lt.s32.totalorder %s19, 1
      %s2051 = scalar_select %p2050, %s19, 1
      %p2052 = scmp.lt.s32.totalorder %s2049, 3
      %s2053 = scalar_select %p2052, %s2049, 3
      %s2054 = smul.addr %s2051, 128
      %s2055 = sadd.s32 %s2053, %s2054
      %s2056 = smul.addr %s2055, 4
      %s2057 = scalar_lea.vmem %s4, %s2056
      // Predicated region
      $region37: #{upsample3d_block.1} parent=35 // pred_check
        %p2058 = pneg %p138
      $region38: #{upsample3d_block.1} parent=35 // pred_check_branch
        %2060 = sbr.rel (%p2058) target = $region40
      $region39: #{upsample3d_block.1} parent=35 // pred_region
        %s2061 = smul.u32 4, %s20
      $region40: #{upsample3d_block.1} parent=35 // pred_fallthru
        _
    $region36: #{upsample3d_block.1} parent=5 // pred_fallthru
      _
    %p2062 = scmp.le.s32.totalorder 2, %s10
    // Predicated region
    $region41: #{upsample3d_block.1} parent=5 // pred_check
      %p2063 = pneg %p2062
    $region42: #{upsample3d_block.1} parent=5 // pred_check_branch
      %2065 = sbr.rel (%p2063) target = $region44
    $region43: #{upsample3d_block.1} parent=5 // pred_region
      %s2066 = ssub.s32 %s10, 2
      // Predicated region
      $region45: #{upsample3d_block.1} parent=43 // pred_check
        %p2067 = pneg %p144
      $region46: #{upsample3d_block.1} parent=43 // pred_check_branch
        %2069 = sbr.rel (%p2067) target = $region48
      $region47: #{upsample3d_block.1} parent=43 // pred_region
        %s2070 = smul.u32 4, %s22
        %p2071 = scmp.lt.s32.totalorder %s21, 1
        %s2072 = scalar_select %p2071, %s21, 1
        %p2073 = scmp.lt.s32.totalorder %s2070, 3
        %s2074 = scalar_select %p2073, %s2070, 3
        %s2075 = smul.addr %s2072, 128
        %s2076 = sadd.s32 %s2074, %s2075
        %s2077 = smul.addr %s2076, 4
        %s2078 = scalar_lea.vmem %s4, %s2077
      $region48: #{upsample3d_block.1} parent=43 // pred_fallthru
        _
    $region44: #{upsample3d_block.1} parent=5 // pred_fallthru
      _
  $region6: #{upsample3d_block.1} parent=0 // loop_footer
    %s14 = sadd.s32 1, %s10
  $region7: #{upsample3d_block.1} parent=0 // loop_footer_branch
    %9 = sbr.rel target = $region3
  $region8: #{upsample3d_block.1} parent=0 // loop_exit
    _

</llo_original>
